<compile_context>
chip_gen: v6e
topology: v6e:2x2x1
jax: 0.10.0
libtpu: 0.0.40
codegen_flags: <defaults>
</compile_context>

<pallas_src>
import jax
import jax.numpy as jnp
from jax import lax
from jax.experimental import pallas as pl
from jax.experimental.pallas import tpu as pltpu  # noqa: F401 (kept for clarity)

# ----------------------------- config -------------------------------------
B = 2               # batch size
N = 16              # max number of nodes per graph
INPUT_DIM = 8       # config.model.input_dim
HIDDEN_DIM = [32, 32]
OUTPUT_DIM = 4      # config.model.output_dim
NUM_LAYER = len(HIDDEN_DIM)      # == len(dim_list) - 2
K = 3               # polynomial_order
E = 2               # num_edgetype (num_bond_type)
NUM_ATOM = 10
DROPOUT = 0.0       # eval mode -> dropout is a no-op

DIM_LIST = [INPUT_DIM] + HIDDEN_DIM + [OUTPUT_DIM]
NUM_OP = E + K          # propagation operators per layer: msg_1..msg_E, T1..TK
NUM_BLK = NUM_OP + 1    # feature blocks per layer (ops + raw state)
BN = B * N


# ------------------------- fused Pallas kernel ------------------------------
def fused_forward_kernel(nf_ref, emb_ref, Lbig_ref, *refs):
  """Embedding -> NUM_LAYER Chebyshev graph-conv layers -> readout.

  refs = (w_0, b_0, ..., w_{NUM_LAYER-1}, b_{NUM_LAYER-1}, w_ro, b_ro, out_ref)
  All B graphs are processed together: the node state is (B*N, d).
  """
  out_ref = refs[-1]
  wro_ref = refs[2 * NUM_LAYER]
  bro_ref = refs[2 * NUM_LAYER + 1]

  # ---- embedding lookup as one-hot @ table (in-kernel gather, exact f32) --
  nf = nf_ref[...]                                              # (BN, 1) int32
  atom_iota = lax.broadcasted_iota(jnp.int32, (BN, NUM_ATOM), 1)
  one_hot = (nf == atom_iota).astype(jnp.float32)               # (BN, A)
  state = jnp.dot(one_hot, emb_ref[...],
                  preferred_element_type=jnp.float32)           # (BN, INPUT_DIM)

  Lbig = Lbig_ref[...]                                          # (NUM_OP*BN, BN)

  # ---- graph-conv layers (statically unrolled; dims differ per layer) ----
  for tt in range(NUM_LAYER):
    w_ref = refs[2 * tt]
    b_ref = refs[2 * tt + 1]
    din = DIM_LIST[tt]

    # ONE MXU push computes all E edge-type messages and all K Chebyshev
    # terms for every graph in the batch (block j lives in rows
    # [j*BN, (j+1)*BN) of `prop`, graph-major within each block).
    prop = jnp.dot(Lbig, state, preferred_element_type=jnp.float32)

    # Per-block partial matmuls accumulated in registers -- mathematically
    # identical to concat(msg_1..msg_E, T1..TK, state) @ W, but with no VMEM
    # feature scratch and no lane repacking.  Weight slices are static,
    # sublane-aligned slices of the weight ref (offsets are multiples of 8).
    z = jnp.dot(state, w_ref[NUM_OP * din:(NUM_OP + 1) * din, :],
                preferred_element_type=jnp.float32)             # raw-state blk
    for j in range(NUM_OP):
      z = z + jnp.dot(prop[j * BN:(j + 1) * BN, :],
                      w_ref[j * din:(j + 1) * din, :],
                      preferred_element_type=jnp.float32)
    state = jnp.maximum(z + b_ref[...], 0.0)                    # (BN, dout)
    # TODO(synk): dropout not implemented in-kernel (eval mode, p=0.0).

  # ---- readout: fused [out | att] Linear, sigmoid gate, per-graph mean ----
  z = jnp.dot(state, wro_ref[...],
              preferred_element_type=jnp.float32) + bro_ref[...]  # (BN, P+1)
  y = z[:, 0:OUTPUT_DIM]
  att = jax.nn.sigmoid(z[:, OUTPUT_DIM:OUTPUT_DIM + 1])
  gated = att * y                                               # (BN, P)
  for bb in range(B):
    out_ref[bb:bb + 1, :] = jnp.mean(gated[bb * N:(bb + 1) * N, :],
                                     axis=0, keepdims=True)
  # TODO(synk): node `mask` (masked mean) path not implemented (mask=None).


# --------------------------- wrapper ----------------------------------------
def chebynet_forward(node_feat, L, params):
  """node_feat: int32 (B, N);  L: float32 (B, N, N, E+1);  returns (B, P)."""
  # ---- operator prep (ideally hoisted into the data pipeline / done once
  # per graph if L is reused across calls -- see perf review).  Precompute
  # the Chebyshev polynomials T_1..T_K of L0 and stack them with the E
  # edge-type operators, block-diagonally over the batch, so the kernel
  # needs exactly one MXU propagation push per layer.
  L0 = L[..., 0]                                          # (B, N, N)
  eye_n = jnp.eye(N, dtype=jnp.float32)
  cheb = [L0]                                             # T_1
  if K >= 2:
    cheb.append(2.0 * jnp.matmul(L0, L0) - eye_n)         # T_2
  for _ in range(3, K + 1):
    cheb.append(2.0 * jnp.matmul(L0, cheb[-1]) - cheb[-2])
  ops = [L[..., ii] for ii in range(1, E + 1)] + cheb     # NUM_OP x (B, N, N)
  ops = jnp.stack(ops, axis=0)                            # (NUM_OP, B, N, N)
  eye_b = jnp.eye(B, dtype=jnp.float32)
  # Lbig[(j,b,n), (c,m)] = ops[j,b,n,m] * delta(b,c)  ->  ((E+K)*B*N, B*N)
  Lbig = jnp.einsum("jbnm,bc->jbncm", ops, eye_b).reshape(NUM_OP * BN, BN)

  nf = node_feat.reshape(BN, 1).astype(jnp.int32)

  # Fold the attention head into the readout Linear (one matmul in-kernel).
  w_ro = jnp.concatenate([params["out_w"], params["att_w"]], axis=1)
  b_ro = jnp.concatenate([params["out_b"], params["att_b"]], axis=1)

  args = [nf, params["embedding"], Lbig]
  for tt in range(NUM_LAYER):
    args += [params["filter_w"][tt], params["filter_b"][tt]]
  args += [w_ro, b_ro]

  # Single invocation, no grid: the whole working set (~50 KiB) fits in VMEM,
  # so default whole-array blocks are used and there is no per-step pipeline
  # overhead (review: collapse grid=(B,) on single-TC v5e/v6e).
  return pl.pallas_call(
      fused_forward_kernel,
      out_shape=jax.ShapeDtypeStruct((B, OUTPUT_DIM), jnp.float32),
  )(*args)


# ---------------------- deterministic parameter init -----------------------
def xavier_uniform(key, fan_in, fan_out):
  bound = (6.0 / (fan_in + fan_out)) ** 0.5
  return jax.random.uniform(key, (fan_in, fan_out), jnp.float32,
                            minval=-bound, maxval=bound)


def init_params(key):
  keys = jax.random.split(key, NUM_LAYER + 4)
  params = {"filter_w": [], "filter_b": []}
  for tt in range(NUM_LAYER):
    fin = DIM_LIST[tt] * NUM_BLK
    fout = DIM_LIST[tt + 1]
    params["filter_w"].append(xavier_uniform(keys[tt], fin, fout))
    params["filter_b"].append(jnp.zeros((1, fout), jnp.float32))
  params["out_w"] = xavier_uniform(keys[NUM_LAYER], DIM_LIST[-2], DIM_LIST[-1])
  params["out_b"] = jnp.zeros((1, DIM_LIST[-1]), jnp.float32)
  params["att_w"] = xavier_uniform(keys[NUM_LAYER + 1], DIM_LIST[-2], 1)
  params["att_b"] = jnp.zeros((1, 1), jnp.float32)
  params["embedding"] = jax.random.normal(
      keys[NUM_LAYER + 2], (NUM_ATOM, INPUT_DIM), jnp.float32)
  return params


# ------------------------ pure-JAX reference --------------------------------
def chebynet_reference(node_feat, L, params):
  state = params["embedding"][node_feat]
  for tt in range(NUM_LAYER):
    L0 = L[..., 0]
    scale = [None] * (K + 1)
    scale[-1] = state
    scale[0] = jnp.einsum("bij,bjd->bid", L0, state)
    for kk in range(1, K):
      scale[kk] = 2.0 * jnp.einsum("bij,bjd->bid", L0, scale[kk - 1]) \
          - scale[kk - 2]
    msg = [jnp.einsum("bij,bjd->bid", L[..., ii], state)
           for ii in range(1, E + 1)]
    msg = jnp.concatenate(msg + scale, axis=2)
    state = jax.nn.relu(msg @ params["filter_w"][tt] + params["filter_b"][tt])
  y = state @ params["out_w"] + params["out_b"]
  att = jax.nn.sigmoid(state @ params["att_w"] + params["att_b"])
  return jnp.mean(att * y, axis=1)


# ------------------------------- main ---------------------------------------
if __name__ == "__main__":
  key = jax.random.PRNGKey(0)
  k_nf, k_L, k_param = jax.random.split(key, 3)

  node_feat = jax.random.randint(k_nf, (B, N), 0, NUM_ATOM, dtype=jnp.int32)
  L = jax.random.normal(k_L, (B, N, N, E + 1), jnp.float32) * 0.1

  params = init_params(k_param)

  fwd = jax.jit(chebynet_forward)
  score = jax.block_until_ready(fwd(node_feat, L, params))

  ref = jax.block_until_ready(chebynet_reference(node_feat, L, params))
  assert score.shape == (B, OUTPUT_DIM)
  assert jnp.allclose(score, ref, atol=1e-4, rtol=1e-4), (score, ref)

  print("KERNEL_OK")
</pallas_src>

<mosaic_0001>
module attributes {stable_mosaic.version = 11 : i64} {
  func.func @fused_forward_kernel(%arg0: memref<32x1xi32, #tpu.memory_space<vmem>>, %arg1: memref<10x8xf32, #tpu.memory_space<vmem>>, %arg2: memref<160x32xf32, #tpu.memory_space<vmem>>, %arg3: memref<48x32xf32, #tpu.memory_space<vmem>>, %arg4: memref<1x32xf32, #tpu.memory_space<vmem>>, %arg5: memref<192x32xf32, #tpu.memory_space<vmem>>, %arg6: memref<1x32xf32, #tpu.memory_space<vmem>>, %arg7: memref<32x5xf32, #tpu.memory_space<vmem>>, %arg8: memref<1x5xf32, #tpu.memory_space<vmem>>, %arg9: memref<2x4xf32, #tpu.memory_space<vmem>>) attributes {dimension_semantics = [], scalar_prefetch = 0 : i64, scratch_operands = 0 : i64, tpu.core_type = #tpu.core_type<tc>} {
    %c0 = arith.constant 0 : index
    %c0_0 = arith.constant 0 : index
    %0 = vector.load %arg0[%c0, %c0_0] : memref<32x1xi32, #tpu.memory_space<vmem>>, vector<32x1xi32>
    %1 = tpu.iota {dimensions = array<i32: 1>} : vector<32x10xi32>
    %2 = vector.broadcast %0 : vector<32x1xi32> to vector<32x10xi32>
    %3 = arith.cmpi eq, %2, %1 : vector<32x10xi32>
    %4 = arith.extui %3 : vector<32x10xi1> to vector<32x10xi32>
    %5 = arith.sitofp %4 : vector<32x10xi32> to vector<32x10xf32>
    %c0_1 = arith.constant 0 : index
    %c0_2 = arith.constant 0 : index
    %6 = vector.load %arg1[%c0_1, %c0_2] : memref<10x8xf32, #tpu.memory_space<vmem>>, vector<10x8xf32>
    %cst = arith.constant dense<0.000000e+00> : vector<32x8xf32>
    %7 = tpu.matmul %5, %6, %cst {dimension_numbers = #tpu.dot_dimension_numbers<[1], [0], [0], [1], [0, 0, 1, 1], [], []>} : vector<32x10xf32>, vector<10x8xf32>, vector<32x8xf32> -> vector<32x8xf32>
    %c0_3 = arith.constant 0 : index
    %c0_4 = arith.constant 0 : index
    %8 = vector.load %arg2[%c0_3, %c0_4] : memref<160x32xf32, #tpu.memory_space<vmem>>, vector<160x32xf32>
    %cst_5 = arith.constant dense<0.000000e+00> : vector<160x8xf32>
    %9 = tpu.matmul %8, %7, %cst_5 {dimension_numbers = #tpu.dot_dimension_numbers<[1], [0], [0], [1], [0, 0, 1, 1], [], []>} : vector<160x32xf32>, vector<32x8xf32>, vector<160x8xf32> -> vector<160x8xf32>
    %c40 = arith.constant 40 : index
    %c0_6 = arith.constant 0 : index
    %10 = vector.load %arg3[%c40, %c0_6] : memref<48x32xf32, #tpu.memory_space<vmem>>, vector<8x32xf32>
    %cst_7 = arith.constant dense<0.000000e+00> : vector<32x32xf32>
    %11 = tpu.matmul %7, %10, %cst_7 {dimension_numbers = #tpu.dot_dimension_numbers<[1], [0], [0], [1], [0, 0, 1, 1], [], []>} : vector<32x8xf32>, vector<8x32xf32>, vector<32x32xf32> -> vector<32x32xf32>
    %12 = vector.extract_strided_slice %9 {offsets = [0, 0], sizes = [32, 8], strides = [1, 1]} : vector<160x8xf32> to vector<32x8xf32>
    %c0_8 = arith.constant 0 : index
    %c0_9 = arith.constant 0 : index
    %13 = vector.load %arg3[%c0_8, %c0_9] : memref<48x32xf32, #tpu.memory_space<vmem>>, vector<8x32xf32>
    %cst_10 = arith.constant dense<0.000000e+00> : vector<32x32xf32>
    %14 = tpu.matmul %12, %13, %cst_10 {dimension_numbers = #tpu.dot_dimension_numbers<[1], [0], [0], [1], [0, 0, 1, 1], [], []>} : vector<32x8xf32>, vector<8x32xf32>, vector<32x32xf32> -> vector<32x32xf32>
    %15 = arith.addf %11, %14 : vector<32x32xf32>
    %16 = vector.extract_strided_slice %9 {offsets = [32, 0], sizes = [32, 8], strides = [1, 1]} : vector<160x8xf32> to vector<32x8xf32>
    %c8 = arith.constant 8 : index
    %c0_11 = arith.constant 0 : index
    %17 = vector.load %arg3[%c8, %c0_11] : memref<48x32xf32, #tpu.memory_space<vmem>>, vector<8x32xf32>
    %cst_12 = arith.constant dense<0.000000e+00> : vector<32x32xf32>
    %18 = tpu.matmul %16, %17, %cst_12 {dimension_numbers = #tpu.dot_dimension_numbers<[1], [0], [0], [1], [0, 0, 1, 1], [], []>} : vector<32x8xf32>, vector<8x32xf32>, vector<32x32xf32> -> vector<32x32xf32>
    %19 = arith.addf %15, %18 : vector<32x32xf32>
    %20 = vector.extract_strided_slice %9 {offsets = [64, 0], sizes = [32, 8], strides = [1, 1]} : vector<160x8xf32> to vector<32x8xf32>
    %c16 = arith.constant 16 : index
    %c0_13 = arith.constant 0 : index
    %21 = vector.load %arg3[%c16, %c0_13] : memref<48x32xf32, #tpu.memory_space<vmem>>, vector<8x32xf32>
    %cst_14 = arith.constant dense<0.000000e+00> : vector<32x32xf32>
    %22 = tpu.matmul %20, %21, %cst_14 {dimension_numbers = #tpu.dot_dimension_numbers<[1], [0], [0], [1], [0, 0, 1, 1], [], []>} : vector<32x8xf32>, vector<8x32xf32>, vector<32x32xf32> -> vector<32x32xf32>
    %23 = arith.addf %19, %22 : vector<32x32xf32>
    %24 = vector.extract_strided_slice %9 {offsets = [96, 0], sizes = [32, 8], strides = [1, 1]} : vector<160x8xf32> to vector<32x8xf32>
    %c24 = arith.constant 24 : index
    %c0_15 = arith.constant 0 : index
    %25 = vector.load %arg3[%c24, %c0_15] : memref<48x32xf32, #tpu.memory_space<vmem>>, vector<8x32xf32>
    %cst_16 = arith.constant dense<0.000000e+00> : vector<32x32xf32>
    %26 = tpu.matmul %24, %25, %cst_16 {dimension_numbers = #tpu.dot_dimension_numbers<[1], [0], [0], [1], [0, 0, 1, 1], [], []>} : vector<32x8xf32>, vector<8x32xf32>, vector<32x32xf32> -> vector<32x32xf32>
    %27 = arith.addf %23, %26 : vector<32x32xf32>
    %28 = vector.extract_strided_slice %9 {offsets = [128, 0], sizes = [32, 8], strides = [1, 1]} : vector<160x8xf32> to vector<32x8xf32>
    %c32 = arith.constant 32 : index
    %c0_17 = arith.constant 0 : index
    %29 = vector.load %arg3[%c32, %c0_17] : memref<48x32xf32, #tpu.memory_space<vmem>>, vector<8x32xf32>
    %cst_18 = arith.constant dense<0.000000e+00> : vector<32x32xf32>
    %30 = tpu.matmul %28, %29, %cst_18 {dimension_numbers = #tpu.dot_dimension_numbers<[1], [0], [0], [1], [0, 0, 1, 1], [], []>} : vector<32x8xf32>, vector<8x32xf32>, vector<32x32xf32> -> vector<32x32xf32>
    %31 = arith.addf %27, %30 : vector<32x32xf32>
    %c0_19 = arith.constant 0 : index
    %c0_20 = arith.constant 0 : index
    %32 = vector.load %arg4[%c0_19, %c0_20] : memref<1x32xf32, #tpu.memory_space<vmem>>, vector<1x32xf32>
    %33 = vector.broadcast %32 : vector<1x32xf32> to vector<32x32xf32>
    %34 = arith.addf %31, %33 : vector<32x32xf32>
    %cst_21 = arith.constant 0.000000e+00 : f32
    %35 = vector.broadcast %cst_21 : f32 to vector<32x32xf32>
    %36 = arith.maximumf %34, %35 : vector<32x32xf32>
    %cst_22 = arith.constant dense<0.000000e+00> : vector<160x32xf32>
    %37 = tpu.matmul %8, %36, %cst_22 {dimension_numbers = #tpu.dot_dimension_numbers<[1], [0], [0], [1], [0, 0, 1, 1], [], []>} : vector<160x32xf32>, vector<32x32xf32>, vector<160x32xf32> -> vector<160x32xf32>
    %c160 = arith.constant 160 : index
    %c0_23 = arith.constant 0 : index
    %38 = vector.load %arg5[%c160, %c0_23] : memref<192x32xf32, #tpu.memory_space<vmem>>, vector<32x32xf32>
    %cst_24 = arith.constant dense<0.000000e+00> : vector<32x32xf32>
    %39 = tpu.matmul %36, %38, %cst_24 {dimension_numbers = #tpu.dot_dimension_numbers<[1], [0], [0], [1], [0, 0, 1, 1], [], []>} : vector<32x32xf32>, vector<32x32xf32>, vector<32x32xf32> -> vector<32x32xf32>
    %40 = vector.extract_strided_slice %37 {offsets = [0, 0], sizes = [32, 32], strides = [1, 1]} : vector<160x32xf32> to vector<32x32xf32>
    %c0_25 = arith.constant 0 : index
    %c0_26 = arith.constant 0 : index
    %41 = vector.load %arg5[%c0_25, %c0_26] : memref<192x32xf32, #tpu.memory_space<vmem>>, vector<32x32xf32>
    %cst_27 = arith.constant dense<0.000000e+00> : vector<32x32xf32>
    %42 = tpu.matmul %40, %41, %cst_27 {dimension_numbers = #tpu.dot_dimension_numbers<[1], [0], [0], [1], [0, 0, 1, 1], [], []>} : vector<32x32xf32>, vector<32x32xf32>, vector<32x32xf32> -> vector<32x32xf32>
    %43 = arith.addf %39, %42 : vector<32x32xf32>
    %44 = vector.extract_strided_slice %37 {offsets = [32, 0], sizes = [32, 32], strides = [1, 1]} : vector<160x32xf32> to vector<32x32xf32>
    %c32_28 = arith.constant 32 : index
    %c0_29 = arith.constant 0 : index
    %45 = vector.load %arg5[%c32_28, %c0_29] : memref<192x32xf32, #tpu.memory_space<vmem>>, vector<32x32xf32>
    %cst_30 = arith.constant dense<0.000000e+00> : vector<32x32xf32>
    %46 = tpu.matmul %44, %45, %cst_30 {dimension_numbers = #tpu.dot_dimension_numbers<[1], [0], [0], [1], [0, 0, 1, 1], [], []>} : vector<32x32xf32>, vector<32x32xf32>, vector<32x32xf32> -> vector<32x32xf32>
    %47 = arith.addf %43, %46 : vector<32x32xf32>
    %48 = vector.extract_strided_slice %37 {offsets = [64, 0], sizes = [32, 32], strides = [1, 1]} : vector<160x32xf32> to vector<32x32xf32>
    %c64 = arith.constant 64 : index
    %c0_31 = arith.constant 0 : index
    %49 = vector.load %arg5[%c64, %c0_31] : memref<192x32xf32, #tpu.memory_space<vmem>>, vector<32x32xf32>
    %cst_32 = arith.constant dense<0.000000e+00> : vector<32x32xf32>
    %50 = tpu.matmul %48, %49, %cst_32 {dimension_numbers = #tpu.dot_dimension_numbers<[1], [0], [0], [1], [0, 0, 1, 1], [], []>} : vector<32x32xf32>, vector<32x32xf32>, vector<32x32xf32> -> vector<32x32xf32>
    %51 = arith.addf %47, %50 : vector<32x32xf32>
    %52 = vector.extract_strided_slice %37 {offsets = [96, 0], sizes = [32, 32], strides = [1, 1]} : vector<160x32xf32> to vector<32x32xf32>
    %c96 = arith.constant 96 : index
    %c0_33 = arith.constant 0 : index
    %53 = vector.load %arg5[%c96, %c0_33] : memref<192x32xf32, #tpu.memory_space<vmem>>, vector<32x32xf32>
    %cst_34 = arith.constant dense<0.000000e+00> : vector<32x32xf32>
    %54 = tpu.matmul %52, %53, %cst_34 {dimension_numbers = #tpu.dot_dimension_numbers<[1], [0], [0], [1], [0, 0, 1, 1], [], []>} : vector<32x32xf32>, vector<32x32xf32>, vector<32x32xf32> -> vector<32x32xf32>
    %55 = arith.addf %51, %54 : vector<32x32xf32>
    %56 = vector.extract_strided_slice %37 {offsets = [128, 0], sizes = [32, 32], strides = [1, 1]} : vector<160x32xf32> to vector<32x32xf32>
    %c128 = arith.constant 128 : index
    %c0_35 = arith.constant 0 : index
    %57 = vector.load %arg5[%c128, %c0_35] : memref<192x32xf32, #tpu.memory_space<vmem>>, vector<32x32xf32>
    %cst_36 = arith.constant dense<0.000000e+00> : vector<32x32xf32>
    %58 = tpu.matmul %56, %57, %cst_36 {dimension_numbers = #tpu.dot_dimension_numbers<[1], [0], [0], [1], [0, 0, 1, 1], [], []>} : vector<32x32xf32>, vector<32x32xf32>, vector<32x32xf32> -> vector<32x32xf32>
    %59 = arith.addf %55, %58 : vector<32x32xf32>
    %c0_37 = arith.constant 0 : index
    %c0_38 = arith.constant 0 : index
    %60 = vector.load %arg6[%c0_37, %c0_38] : memref<1x32xf32, #tpu.memory_space<vmem>>, vector<1x32xf32>
    %61 = vector.broadcast %60 : vector<1x32xf32> to vector<32x32xf32>
    %62 = arith.addf %59, %61 : vector<32x32xf32>
    %cst_39 = arith.constant 0.000000e+00 : f32
    %63 = vector.broadcast %cst_39 : f32 to vector<32x32xf32>
    %64 = arith.maximumf %62, %63 : vector<32x32xf32>
    %c0_40 = arith.constant 0 : index
    %c0_41 = arith.constant 0 : index
    %65 = vector.load %arg7[%c0_40, %c0_41] : memref<32x5xf32, #tpu.memory_space<vmem>>, vector<32x5xf32>
    %cst_42 = arith.constant dense<0.000000e+00> : vector<32x5xf32>
    %66 = tpu.matmul %64, %65, %cst_42 {dimension_numbers = #tpu.dot_dimension_numbers<[1], [0], [0], [1], [0, 0, 1, 1], [], []>} : vector<32x32xf32>, vector<32x5xf32>, vector<32x5xf32> -> vector<32x5xf32>
    %c0_43 = arith.constant 0 : index
    %c0_44 = arith.constant 0 : index
    %67 = vector.load %arg8[%c0_43, %c0_44] : memref<1x5xf32, #tpu.memory_space<vmem>>, vector<1x5xf32>
    %68 = vector.broadcast %67 : vector<1x5xf32> to vector<32x5xf32>
    %69 = arith.addf %66, %68 : vector<32x5xf32>
    %70 = vector.extract_strided_slice %69 {offsets = [0, 0], sizes = [32, 4], strides = [1, 1]} : vector<32x5xf32> to vector<32x4xf32>
    %71 = vector.extract_strided_slice %69 {offsets = [0, 4], sizes = [32, 1], strides = [1, 1]} : vector<32x5xf32> to vector<32x1xf32>
    %72 = arith.negf %71 : vector<32x1xf32>
    %73 = math.exp %72 : vector<32x1xf32>
    %cst_45 = arith.constant 1.000000e+00 : f32
    %74 = vector.broadcast %cst_45 : f32 to vector<32x1xf32>
    %75 = arith.addf %74, %73 : vector<32x1xf32>
    %76 = arith.divf %74, %75 : vector<32x1xf32>
    %77 = vector.broadcast %76 : vector<32x1xf32> to vector<32x4xf32>
    %78 = arith.mulf %77, %70 : vector<32x4xf32>
    %79 = vector.extract_strided_slice %78 {offsets = [0, 0], sizes = [16, 4], strides = [1, 1]} : vector<32x4xf32> to vector<16x4xf32>
    %cst_46 = arith.constant dense<0.000000e+00> : vector<4xf32>
    %80 = vector.multi_reduction <add>, %79, %cst_46 [0] : vector<16x4xf32> to vector<4xf32>
    %81 = vector.shape_cast %80 : vector<4xf32> to vector<1x4xf32>
    %cst_47 = arith.constant 1.600000e+01 : f32
    %82 = vector.broadcast %cst_47 : f32 to vector<1x4xf32>
    %83 = arith.divf %81, %82 : vector<1x4xf32>
    %c0_48 = arith.constant 0 : index
    %c0_49 = arith.constant 0 : index
    %84 = vector.load %arg9[%c0_48, %c0_49] : memref<2x4xf32, #tpu.memory_space<vmem>>, vector<1x4xf32>
    tpu.vector_store %arg9[%c0_48, %c0_49], %83 {strides = array<i32>} : memref<2x4xf32, #tpu.memory_space<vmem>>, vector<1x4xf32>,
    %85 = vector.extract_strided_slice %78 {offsets = [16, 0], sizes = [16, 4], strides = [1, 1]} : vector<32x4xf32> to vector<16x4xf32>
    %cst_50 = arith.constant dense<0.000000e+00> : vector<4xf32>
    %86 = vector.multi_reduction <add>, %85, %cst_50 [0] : vector<16x4xf32> to vector<4xf32>
    %87 = vector.shape_cast %86 : vector<4xf32> to vector<1x4xf32>
    %cst_51 = arith.constant 1.600000e+01 : f32
    %88 = vector.broadcast %cst_51 : f32 to vector<1x4xf32>
    %89 = arith.divf %87, %88 : vector<1x4xf32>
    %c1 = arith.constant 1 : index
    %c0_52 = arith.constant 0 : index
    %90 = vector.load %arg9[%c1, %c0_52] : memref<2x4xf32, #tpu.memory_space<vmem>>, vector<1x4xf32>
    tpu.vector_store %arg9[%c1, %c0_52], %89 {strides = array<i32>} : memref<2x4xf32, #tpu.memory_space<vmem>>, vector<1x4xf32>,
    return
  }
}

</mosaic_0001>

<llo_original>
// kernel: chebynet_forward.1
$region0: #{chebynet_forward.1}
  #allocation0 [shape = 'u32[]', space=smem, size = 0x4, offset = 0x4, fixed_abs, tag = 'smem constant byte address 0x4 - core index']
  #allocation1 [shape = 'u32[144,128]{1,0:T(1,128)}', space=vmem, size = 0x12000, scoped, tag = 'internal scratch']
  %s0 = inlined_call_operand.vmem [shape: s32[32,1], index: 0, kind: input, shape index: {}]
  %s1 = inlined_call_operand.vmem [shape: f32[10,8], index: 1, kind: input, shape index: {}]
  %s2 = inlined_call_operand.vmem [shape: f32[160,32], index: 2, kind: input, shape index: {}]
  %s3 = inlined_call_operand.vmem [shape: f32[48,32], index: 3, kind: input, shape index: {}]
  %s4 = inlined_call_operand.vmem [shape: f32[1,32], index: 4, kind: input, shape index: {}]
  %s5 = inlined_call_operand.vmem [shape: f32[192,32], index: 5, kind: input, shape index: {}]
  %s6 = inlined_call_operand.vmem [shape: f32[1,32], index: 6, kind: input, shape index: {}]
  %s7 = inlined_call_operand.vmem [shape: f32[32,5], index: 7, kind: input, shape index: {}]
  %s8 = inlined_call_operand.vmem [shape: f32[1,5], index: 8, kind: input, shape index: {}]
  %s9 = inlined_call_operand.hbm [shape: f32[2,4], index: 9, kind: output, shape index: {}]
  %s10 = sld [smem:[#allocation0]]
  $region46: #{chebynet_forward.1} parent=0
    _
  %s12 = ssub.s32 1, %s10
  %s13 = scalar_select 0, %s12, %s10
  $region1: #{chebynet_forward.1} parent=0
    #allocation2 [shape = 'u8[1024]{0}', space=vmem, size = 0x400, scoped, tag = 'output window, operand 0, single buffered']
    #allocation3 [shape = 's32[1]{0}', space=sflag, size = 0x4, scoped, tag = 'scoped memory for chebynet_forward.1']
    %14 = vsyncpa [#allocation3], 0
    // Predicated region
    $region2: #{chebynet_forward.1} parent=1 // pred_check
      _
    $region3: #{chebynet_forward.1} parent=1 // pred_check_branch
      %16 = sbr.rel (0) target = $region5
    $region4: #{chebynet_forward.1} parent=1 // pred_region
      _
    $region5: #{chebynet_forward.1} parent=1 // pred_fallthru
      _
    // Predicated region
    $region6: #{chebynet_forward.1} parent=1 // pred_check
      _
    $region7: #{chebynet_forward.1} parent=1 // pred_check_branch
      %18 = sbr.rel (0) target = $region9
    $region8: #{chebynet_forward.1} parent=1 // pred_region
      _
    $region9: #{chebynet_forward.1} parent=1 // pred_fallthru
      _
    // Predicated region
    $region10: #{chebynet_forward.1} parent=1 // pred_check
      _
    $region11: #{chebynet_forward.1} parent=1 // pred_check_branch
      %20 = sbr.rel (0) target = $region13
    $region12: #{chebynet_forward.1} parent=1 // pred_region
      _
    $region13: #{chebynet_forward.1} parent=1 // pred_fallthru
      _
    // Predicated region
    $region14: #{chebynet_forward.1} parent=1 // pred_check
      _
    $region15: #{chebynet_forward.1} parent=1 // pred_check_branch
      %22 = sbr.rel (0) target = $region17
    $region16: #{chebynet_forward.1} parent=1 // pred_region
      _
    $region17: #{chebynet_forward.1} parent=1 // pred_fallthru
      _
    // Predicated region
    $region18: #{chebynet_forward.1} parent=1 // pred_check
      _
    $region19: #{chebynet_forward.1} parent=1 // pred_check_branch
      %24 = sbr.rel (0) target = $region21
    $region20: #{chebynet_forward.1} parent=1 // pred_region
      _
    $region21: #{chebynet_forward.1} parent=1 // pred_fallthru
      _
    // Predicated region
    $region22: #{chebynet_forward.1} parent=1 // pred_check
      _
    $region23: #{chebynet_forward.1} parent=1 // pred_check_branch
      %26 = sbr.rel (0) target = $region25
    $region24: #{chebynet_forward.1} parent=1 // pred_region
      _
    $region25: #{chebynet_forward.1} parent=1 // pred_fallthru
      _
    // Predicated region
    $region26: #{chebynet_forward.1} parent=1 // pred_check
      _
    $region27: #{chebynet_forward.1} parent=1 // pred_check_branch
      %28 = sbr.rel (0) target = $region29
    $region28: #{chebynet_forward.1} parent=1 // pred_region
      _
    $region29: #{chebynet_forward.1} parent=1 // pred_fallthru
      _
    // Predicated region
    $region30: #{chebynet_forward.1} parent=1 // pred_check
      _
    $region31: #{chebynet_forward.1} parent=1 // pred_check_branch
      %30 = sbr.rel (0) target = $region33
    $region32: #{chebynet_forward.1} parent=1 // pred_region
      _
    $region33: #{chebynet_forward.1} parent=1 // pred_fallthru
      _
    // Predicated region
    $region34: #{chebynet_forward.1} parent=1 // pred_check
      _
    $region35: #{chebynet_forward.1} parent=1 // pred_check_branch
      %32 = sbr.rel (0) target = $region37
    $region36: #{chebynet_forward.1} parent=1 // pred_region
      _
    $region37: #{chebynet_forward.1} parent=1 // pred_fallthru
      _
    %v33 = vld [vmem:[%s0] sm:$0xff]
    %v34 = vld [vmem:[%s0 + $0x8] sm:$0xff]
    %v35 = vld [vmem:[%s0 + $0x10] sm:$0xff]
    %v36 = vld [vmem:[%s0 + $0x18] sm:$0xff]
    %v37 = vlaneseq
    %v38 = vand.u32 %v37, 127
    %39 = vset.pattern.permute.xlu0 0
    %40 = vperm.xlu0 %39, %v33
    %v41 = vpop.permute.xlu0 %40
    %42 = vset.pattern.permute.xlu0 0
    %43 = vperm.xlu0 %42, %v34
    %v44 = vpop.permute.xlu0 %43
    %45 = vset.pattern.permute.xlu0 0
    %46 = vperm.xlu0 %45, %v35
    %v47 = vpop.permute.xlu0 %46
    %48 = vset.pattern.permute.xlu0 0
    %49 = vperm.xlu0 %48, %v36
    %v50 = vpop.permute.xlu0 %49
    %vm51 = vcmp.eq.s32.totalorder %v41, %v38
    %vm52 = vcmp.eq.s32.totalorder %v44, %v38
    %vm53 = vcmp.eq.s32.totalorder %v47, %v38
    %vm54 = vcmp.eq.s32.totalorder %v50, %v38
    %v55 = vsel %vm51, 1, 0
    %v56 = vsel %vm52, 1, 0
    %v57 = vsel %vm53, 1, 0
    %v58 = vsel %vm54, 1, 0
    %v59 = vcvt.s32.f32 %v55
    %v60 = vcvt.s32.f32 %v56
    %v61 = vcvt.s32.f32 %v57
    %v62 = vcvt.s32.f32 %v58
    %v63 = vld [vmem:[%s1] sm:$0xff]
    %v64 = vld [vmem:[%s1 + $0x8] sm:$0x3]
    %vm65 = vcmask 80896
    %v67 = vsel %vm65, %v59, 0
    %v70 = vsel %vm65, %v60, 0
    %v73 = vsel %vm65, %v61, 0
    %v76 = vsel %vm65, %v62, 0
    %vm78 = vcmask 1041408
    %v80 = vsel %vm78, %v64, 0
    %82 = vmatprep.subr.mxu0 0.0
    %83 = vmatpush1.msra.mxu0 0.0
    %84 = vmatprep.subr.mxu0 0.0
    %85 = vmatpush1.msra.mxu0 0.0
    %86 = vmatprep.subr.mxu0 0.0
    %87 = vmatpush1.msra.mxu0 0.0
    %88 = vmatprep.subr.mxu0 0.0
    %89 = vmatpush1.msra.mxu0 0.0
    %90 = vmatprep.subr.mxu0 0.0
    %91 = vmatpush1.msra.mxu0 0.0
    %92 = vmatprep.subr.mxu0 0.0
    %93 = vmatpush1.msra.mxu0 0.0
    %94 = vmatprep.subr.mxu0 0.0
    %95 = vmatpush1.msra.mxu0 0.0
    %96 = vmatprep.subr.mxu0 0.0
    %97 = vmatpush1.msra.mxu0 0.0
    %98 = vmatprep.subr.mxu0 0.0
    %99 = vmatpush1.msra.mxu0 0.0
    %100 = vmatprep.subr.mxu0 0.0
    %101 = vmatpush1.msra.mxu0 0.0
    %102 = vmatprep.subr.mxu0 0.0
    %103 = vmatpush1.msra.mxu0 0.0
    %104 = vmatprep.subr.mxu0 0.0
    %105 = vmatpush1.msra.mxu0 0.0
    %106 = vmatprep.subr.mxu0 0.0
    %107 = vmatpush1.msra.mxu0 0.0
    %108 = vmatprep.subr.mxu0 0.0
    %109 = vmatpush1.msra.mxu0 0.0
    %110 = vmatprep.subr.mxu0 0.0
    %111 = vmatpush1.msra.mxu0 %v80
    %112 = vmatprep.subr.mxu0 0.0
    %113 = vmatpush1.msra.mxu0 %v63
    %114 = vmatprep.subr.mxu0 0.0
    %115 = vmatpush2.msra.mxu0 0.0
    %116 = vmatprep.subr.mxu0 0.0
    %117 = vmatpush2.msra.mxu0 0.0
    %118 = vmatprep.subr.mxu0 0.0
    %119 = vmatpush2.msra.mxu0 0.0
    %120 = vmatprep.subr.mxu0 0.0
    %121 = vmatpush2.msra.mxu0 0.0
    %122 = vmatprep.subr.mxu0 0.0
    %123 = vmatpush2.msra.mxu0 0.0
    %124 = vmatprep.subr.mxu0 0.0
    %125 = vmatpush2.msra.mxu0 0.0
    %126 = vmatprep.subr.mxu0 0.0
    %127 = vmatpush2.msra.mxu0 0.0
    %128 = vmatprep.subr.mxu0 0.0
    %129 = vmatpush2.msra.mxu0 0.0
    %130 = vmatprep.subr.mxu0 0.0
    %131 = vmatpush2.msra.mxu0 0.0
    %132 = vmatprep.subr.mxu0 0.0
    %133 = vmatpush2.msra.mxu0 0.0
    %134 = vmatprep.subr.mxu0 0.0
    %135 = vmatpush2.msra.mxu0 0.0
    %136 = vmatprep.subr.mxu0 0.0
    %137 = vmatpush2.msra.mxu0 0.0
    %138 = vmatprep.subr.mxu0 0.0
    %139 = vmatpush2.msra.mxu0 0.0
    %140 = vmatprep.subr.mxu0 0.0
    %141 = vmatpush2.msra.mxu0 0.0
    %142 = vmatprep.subr.mxu0 0.0
    %143 = vmatpush2.msra.mxu0 0.0
    %144 = vmatprep.subr.mxu0 0.0
    %145 = vmatpush2.msra.mxu0 0.0
    %146 = vmatprep.mubr.f32.mxu0 0.0
    %147 = vmatmul.mubr.f32.gmra.mxu0 %v67
    %v148 = vpop.f32.mrf.mxu0
    %v149 = vadd.f32 0.0, %v148
    %v150 = vpop.f32.mrf.mxu0
    %151 = vmatprep.mubr.f32.mxu0 0.0
    %152 = vmatmul.mubr.f32.gmra.mxu0 %v70
    %v153 = vpop.f32.mrf.mxu0
    %v154 = vadd.f32 0.0, %v153
    %v155 = vpop.f32.mrf.mxu0
    %156 = vmatprep.mubr.f32.mxu0 0.0
    %157 = vmatmul.mubr.f32.gmra.mxu0 %v73
    %v158 = vpop.f32.mrf.mxu0
    %v159 = vadd.f32 0.0, %v158
    %v160 = vpop.f32.mrf.mxu0
    %161 = vmatprep.mubr.f32.mxu0 0.0
    %162 = vmatmul.mubr.f32.gmra.mxu0 %v76
    %v163 = vpop.f32.mrf.mxu0
    %v164 = vadd.f32 0.0, %v163
    %v165 = vpop.f32.mrf.mxu0
    %166 = vdwg.mxu0
    %v167 = vld [vmem:[%s2] sm:$0xff]
    %v168 = vld [vmem:[%s2 + $0x8] sm:$0xff]
    %v169 = vld [vmem:[%s2 + $0x10] sm:$0xff]
    %v170 = vld [vmem:[%s2 + $0x18] sm:$0xff]
    %v171 = vld [vmem:[%s2 + $0x20] sm:$0xff]
    %v172 = vld [vmem:[%s2 + $0x28] sm:$0xff]
    %v173 = vld [vmem:[%s2 + $0x30] sm:$0xff]
    %v174 = vld [vmem:[%s2 + $0x38] sm:$0xff]
    %v175 = vld [vmem:[%s2 + $0x40] sm:$0xff]
    %v176 = vld [vmem:[%s2 + $0x48] sm:$0xff]
    %v177 = vld [vmem:[%s2 + $0x50] sm:$0xff]
    %v178 = vld [vmem:[%s2 + $0x58] sm:$0xff]
    %v179 = vld [vmem:[%s2 + $0x60] sm:$0xff]
    %v180 = vld [vmem:[%s2 + $0x68] sm:$0xff]
    %v181 = vld [vmem:[%s2 + $0x70] sm:$0xff]
    %v182 = vld [vmem:[%s2 + $0x78] sm:$0xff]
    %v183 = vld [vmem:[%s2 + $0x80] sm:$0xff]
    %v184 = vld [vmem:[%s2 + $0x88] sm:$0xff]
    %v185 = vld [vmem:[%s2 + $0x90] sm:$0xff]
    %v186 = vld [vmem:[%s2 + $0x98] sm:$0xff]
    %vm187 = vcmask 261120
    %v189 = vsel %vm187, %v167, 0
    %v192 = vsel %vm187, %v168, 0
    %v195 = vsel %vm187, %v169, 0
    %v198 = vsel %vm187, %v170, 0
    %v201 = vsel %vm187, %v171, 0
    %v204 = vsel %vm187, %v172, 0
    %v207 = vsel %vm187, %v173, 0
    %v210 = vsel %vm187, %v174, 0
    %v213 = vsel %vm187, %v175, 0
    %v216 = vsel %vm187, %v176, 0
    %v219 = vsel %vm187, %v177, 0
    %v222 = vsel %vm187, %v178, 0
    %v225 = vsel %vm187, %v179, 0
    %v228 = vsel %vm187, %v180, 0
    %v231 = vsel %vm187, %v181, 0
    %v234 = vsel %vm187, %v182, 0
    %v237 = vsel %vm187, %v183, 0
    %v240 = vsel %vm187, %v184, 0
    %v243 = vsel %vm187, %v185, 0
    %v246 = vsel %vm187, %v186, 0
    %248 = vmatprep.subr.mxu0 0.0
    %249 = vmatpush1.msra.mxu0 0.0
    %250 = vmatprep.subr.mxu0 0.0
    %251 = vmatpush1.msra.mxu0 0.0
    %252 = vmatprep.subr.mxu0 0.0
    %253 = vmatpush1.msra.mxu0 0.0
    %254 = vmatprep.subr.mxu0 0.0
    %255 = vmatpush1.msra.mxu0 0.0
    %256 = vmatprep.subr.mxu0 0.0
    %257 = vmatpush1.msra.mxu0 0.0
    %258 = vmatprep.subr.mxu0 0.0
    %259 = vmatpush1.msra.mxu0 0.0
    %260 = vmatprep.subr.mxu0 0.0
    %261 = vmatpush1.msra.mxu0 0.0
    %262 = vmatprep.subr.mxu0 0.0
    %263 = vmatpush1.msra.mxu0 0.0
    %264 = vmatprep.subr.mxu0 0.0
    %265 = vmatpush1.msra.mxu0 0.0
    %266 = vmatprep.subr.mxu0 0.0
    %267 = vmatpush1.msra.mxu0 0.0
    %268 = vmatprep.subr.mxu0 0.0
    %269 = vmatpush1.msra.mxu0 0.0
    %270 = vmatprep.subr.mxu0 0.0
    %271 = vmatpush1.msra.mxu0 0.0
    %272 = vmatprep.subr.mxu0 0.0
    %273 = vmatpush1.msra.mxu0 %v164
    %274 = vmatprep.subr.mxu0 0.0
    %275 = vmatpush1.msra.mxu0 %v159
    %276 = vmatprep.subr.mxu0 0.0
    %277 = vmatpush1.msra.mxu0 %v154
    %278 = vmatprep.subr.mxu0 0.0
    %279 = vmatpush1.msra.mxu0 %v149
    %280 = vmatprep.subr.mxu0 0.0
    %281 = vmatpush2.msra.mxu0 0.0
    %282 = vmatprep.subr.mxu0 0.0
    %283 = vmatpush2.msra.mxu0 0.0
    %284 = vmatprep.subr.mxu0 0.0
    %285 = vmatpush2.msra.mxu0 0.0
    %286 = vmatprep.subr.mxu0 0.0
    %287 = vmatpush2.msra.mxu0 0.0
    %288 = vmatprep.subr.mxu0 0.0
    %289 = vmatpush2.msra.mxu0 0.0
    %290 = vmatprep.subr.mxu0 0.0
    %291 = vmatpush2.msra.mxu0 0.0
    %292 = vmatprep.subr.mxu0 0.0
    %293 = vmatpush2.msra.mxu0 0.0
    %294 = vmatprep.subr.mxu0 0.0
    %295 = vmatpush2.msra.mxu0 0.0
    %296 = vmatprep.subr.mxu0 0.0
    %297 = vmatpush2.msra.mxu0 0.0
    %298 = vmatprep.subr.mxu0 0.0
    %299 = vmatpush2.msra.mxu0 0.0
    %300 = vmatprep.subr.mxu0 0.0
    %301 = vmatpush2.msra.mxu0 0.0
    %302 = vmatprep.subr.mxu0 0.0
    %303 = vmatpush2.msra.mxu0 0.0
    %304 = vmatprep.subr.mxu0 0.0
    %305 = vmatpush2.msra.mxu0 0.0
    %306 = vmatprep.subr.mxu0 0.0
    %307 = vmatpush2.msra.mxu0 0.0
    %308 = vmatprep.subr.mxu0 0.0
    %309 = vmatpush2.msra.mxu0 0.0
    %310 = vmatprep.subr.mxu0 0.0
    %311 = vmatpush2.msra.mxu0 0.0
    %312 = vmatprep.mubr.f32.mxu0 0.0
    %313 = vmatmul.mubr.f32.gmra.mxu0 %v189
    %v314 = vpop.f32.mrf.mxu0
    %v315 = vadd.f32 0.0, %v314
    %v316 = vpop.f32.mrf.mxu0
    %317 = vmatprep.mubr.f32.mxu0 0.0
    %318 = vmatmul.mubr.f32.gmra.mxu0 %v192
    %v319 = vpop.f32.mrf.mxu0
    %v320 = vadd.f32 0.0, %v319
    %v321 = vpop.f32.mrf.mxu0
    %322 = vmatprep.mubr.f32.mxu0 0.0
    %323 = vmatmul.mubr.f32.gmra.mxu0 %v195
    %v324 = vpop.f32.mrf.mxu0
    %v325 = vadd.f32 0.0, %v324
    %v326 = vpop.f32.mrf.mxu0
    %327 = vmatprep.mubr.f32.mxu0 0.0
    %328 = vmatmul.mubr.f32.gmra.mxu0 %v198
    %v329 = vpop.f32.mrf.mxu0
    %v330 = vadd.f32 0.0, %v329
    %v331 = vpop.f32.mrf.mxu0
    %332 = vmatprep.mubr.f32.mxu0 0.0
    %333 = vmatmul.mubr.f32.gmra.mxu0 %v201
    %v334 = vpop.f32.mrf.mxu0
    %v335 = vadd.f32 0.0, %v334
    %v336 = vpop.f32.mrf.mxu0
    %337 = vmatprep.mubr.f32.mxu0 0.0
    %338 = vmatmul.mubr.f32.gmra.mxu0 %v204
    %v339 = vpop.f32.mrf.mxu0
    %v340 = vadd.f32 0.0, %v339
    %v341 = vpop.f32.mrf.mxu0
    %342 = vmatprep.mubr.f32.mxu0 0.0
    %343 = vmatmul.mubr.f32.gmra.mxu0 %v207
    %v344 = vpop.f32.mrf.mxu0
    %v345 = vadd.f32 0.0, %v344
    %v346 = vpop.f32.mrf.mxu0
    %347 = vmatprep.mubr.f32.mxu0 0.0
    %348 = vmatmul.mubr.f32.gmra.mxu0 %v210
    %v349 = vpop.f32.mrf.mxu0
    %v350 = vadd.f32 0.0, %v349
    %v351 = vpop.f32.mrf.mxu0
    %352 = vmatprep.mubr.f32.mxu0 0.0
    %353 = vmatmul.mubr.f32.gmra.mxu0 %v213
    %v354 = vpop.f32.mrf.mxu0
    %v355 = vadd.f32 0.0, %v354
    %v356 = vpop.f32.mrf.mxu0
    %357 = vmatprep.mubr.f32.mxu0 0.0
    %358 = vmatmul.mubr.f32.gmra.mxu0 %v216
    %v359 = vpop.f32.mrf.mxu0
    %v360 = vadd.f32 0.0, %v359
    %v361 = vpop.f32.mrf.mxu0
    %362 = vmatprep.mubr.f32.mxu0 0.0
    %363 = vmatmul.mubr.f32.gmra.mxu0 %v219
    %v364 = vpop.f32.mrf.mxu0
    %v365 = vadd.f32 0.0, %v364
    %v366 = vpop.f32.mrf.mxu0
    %367 = vmatprep.mubr.f32.mxu0 0.0
    %368 = vmatmul.mubr.f32.gmra.mxu0 %v222
    %v369 = vpop.f32.mrf.mxu0
    %v370 = vadd.f32 0.0, %v369
    %v371 = vpop.f32.mrf.mxu0
    %372 = vmatprep.mubr.f32.mxu0 0.0
    %373 = vmatmul.mubr.f32.gmra.mxu0 %v225
    %v374 = vpop.f32.mrf.mxu0
    %v375 = vadd.f32 0.0, %v374
    %v376 = vpop.f32.mrf.mxu0
    %377 = vmatprep.mubr.f32.mxu0 0.0
    %378 = vmatmul.mubr.f32.gmra.mxu0 %v228
    %v379 = vpop.f32.mrf.mxu0
    %v380 = vadd.f32 0.0, %v379
    %v381 = vpop.f32.mrf.mxu0
    %382 = vmatprep.mubr.f32.mxu0 0.0
    %383 = vmatmul.mubr.f32.gmra.mxu0 %v231
    %v384 = vpop.f32.mrf.mxu0
    %v385 = vadd.f32 0.0, %v384
    %v386 = vpop.f32.mrf.mxu0
    %387 = vmatprep.mubr.f32.mxu0 0.0
    %388 = vmatmul.mubr.f32.gmra.mxu0 %v234
    %v389 = vpop.f32.mrf.mxu0
    %v390 = vadd.f32 0.0, %v389
    %v391 = vpop.f32.mrf.mxu0
    %392 = vmatprep.mubr.f32.mxu0 0.0
    %393 = vmatmul.mubr.f32.gmra.mxu0 %v237
    %v394 = vpop.f32.mrf.mxu0
    %v395 = vadd.f32 0.0, %v394
    %v396 = vpop.f32.mrf.mxu0
    %397 = vmatprep.mubr.f32.mxu0 0.0
    %398 = vmatmul.mubr.f32.gmra.mxu0 %v240
    %v399 = vpop.f32.mrf.mxu0
    %v400 = vadd.f32 0.0, %v399
    %v401 = vpop.f32.mrf.mxu0
    %402 = vmatprep.mubr.f32.mxu0 0.0
    %403 = vmatmul.mubr.f32.gmra.mxu0 %v243
    %v404 = vpop.f32.mrf.mxu0
    %v405 = vadd.f32 0.0, %v404
    %v406 = vpop.f32.mrf.mxu0
    %407 = vmatprep.mubr.f32.mxu0 0.0
    %408 = vmatmul.mubr.f32.gmra.mxu0 %v246
    %v409 = vpop.f32.mrf.mxu0
    %v410 = vadd.f32 0.0, %v409
    %v411 = vpop.f32.mrf.mxu0
    %412 = vdwg.mxu0
    %v413 = vld [vmem:[%s3 + $0x28] sm:$0xff]
    %v414 = vld [vmem:[%s3] sm:$0xff]
    %vm415 = vcmask 64512
    %v417 = vsel %vm415, %v315, 0
    %v420 = vsel %vm415, %v320, 0
    %v423 = vsel %vm415, %v325, 0
    %v426 = vsel %vm415, %v330, 0
    %428 = vmatprep.subr.mxu0 0.0
    %429 = vmatpush1.msra.mxu0 0.0
    %430 = vmatprep.subr.mxu0 0.0
    %431 = vmatpush1.msra.mxu0 0.0
    %432 = vmatprep.subr.mxu0 0.0
    %433 = vmatpush1.msra.mxu0 0.0
    %434 = vmatprep.subr.mxu0 0.0
    %435 = vmatpush1.msra.mxu0 0.0
    %436 = vmatprep.subr.mxu0 0.0
    %437 = vmatpush1.msra.mxu0 0.0
    %438 = vmatprep.subr.mxu0 0.0
    %439 = vmatpush1.msra.mxu0 0.0
    %440 = vmatprep.subr.mxu0 0.0
    %441 = vmatpush1.msra.mxu0 0.0
    %442 = vmatprep.subr.mxu0 0.0
    %443 = vmatpush1.msra.mxu0 0.0
    %444 = vmatprep.subr.mxu0 0.0
    %445 = vmatpush1.msra.mxu0 0.0
    %446 = vmatprep.subr.mxu0 0.0
    %447 = vmatpush1.msra.mxu0 0.0
    %448 = vmatprep.subr.mxu0 0.0
    %449 = vmatpush1.msra.mxu0 0.0
    %450 = vmatprep.subr.mxu0 0.0
    %451 = vmatpush1.msra.mxu0 0.0
    %452 = vmatprep.subr.mxu0 0.0
    %453 = vmatpush1.msra.mxu0 0.0
    %454 = vmatprep.subr.mxu0 0.0
    %455 = vmatpush1.msra.mxu0 0.0
    %456 = vmatprep.subr.mxu0 0.0
    %457 = vmatpush1.msra.mxu0 0.0
    %458 = vmatprep.subr.mxu0 0.0
    %459 = vmatpush1.msra.mxu0 %v414
    %460 = vmatprep.subr.mxu0 0.0
    %461 = vmatpush2.msra.mxu0 0.0
    %462 = vmatprep.subr.mxu0 0.0
    %463 = vmatpush2.msra.mxu0 0.0
    %464 = vmatprep.subr.mxu0 0.0
    %465 = vmatpush2.msra.mxu0 0.0
    %466 = vmatprep.subr.mxu0 0.0
    %467 = vmatpush2.msra.mxu0 0.0
    %468 = vmatprep.subr.mxu0 0.0
    %469 = vmatpush2.msra.mxu0 0.0
    %470 = vmatprep.subr.mxu0 0.0
    %471 = vmatpush2.msra.mxu0 0.0
    %472 = vmatprep.subr.mxu0 0.0
    %473 = vmatpush2.msra.mxu0 0.0
    %474 = vmatprep.subr.mxu0 0.0
    %475 = vmatpush2.msra.mxu0 0.0
    %476 = vmatprep.subr.mxu0 0.0
    %477 = vmatpush2.msra.mxu0 0.0
    %478 = vmatprep.subr.mxu0 0.0
    %479 = vmatpush2.msra.mxu0 0.0
    %480 = vmatprep.subr.mxu0 0.0
    %481 = vmatpush2.msra.mxu0 0.0
    %482 = vmatprep.subr.mxu0 0.0
    %483 = vmatpush2.msra.mxu0 0.0
    %484 = vmatprep.subr.mxu0 0.0
    %485 = vmatpush2.msra.mxu0 0.0
    %486 = vmatprep.subr.mxu0 0.0
    %487 = vmatpush2.msra.mxu0 0.0
    %488 = vmatprep.subr.mxu0 0.0
    %489 = vmatpush2.msra.mxu0 0.0
    %490 = vmatprep.subr.mxu0 0.0
    %491 = vmatpush2.msra.mxu0 0.0
    %492 = vmatprep.mubr.f32.mxu0 0.0
    %493 = vmatmul.mubr.f32.gmra.mxu0 %v417
    %v494 = vpop.f32.mrf.mxu0
    %v495 = vadd.f32 0.0, %v494
    %v496 = vpop.f32.mrf.mxu0
    %497 = vmatprep.mubr.f32.mxu0 0.0
    %498 = vmatmul.mubr.f32.gmra.mxu0 %v420
    %v499 = vpop.f32.mrf.mxu0
    %v500 = vadd.f32 0.0, %v499
    %v501 = vpop.f32.mrf.mxu0
    %502 = vmatprep.mubr.f32.mxu0 0.0
    %503 = vmatmul.mubr.f32.gmra.mxu0 %v423
    %v504 = vpop.f32.mrf.mxu0
    %v505 = vadd.f32 0.0, %v504
    %v506 = vpop.f32.mrf.mxu0
    %507 = vmatprep.mubr.f32.mxu0 0.0
    %508 = vmatmul.mubr.f32.gmra.mxu0 %v426
    %v509 = vpop.f32.mrf.mxu0
    %v510 = vadd.f32 0.0, %v509
    %v511 = vpop.f32.mrf.mxu0
    %512 = vdwg.mxu0
    %v514 = vsel %vm415, %v149, 0
    %v517 = vsel %vm415, %v154, 0
    %v520 = vsel %vm415, %v159, 0
    %v523 = vsel %vm415, %v164, 0
    %525 = vmatprep.subr.mxu0 0.0
    %526 = vmatpush1.msra.mxu0 0.0
    %527 = vmatprep.subr.mxu0 0.0
    %528 = vmatpush1.msra.mxu0 0.0
    %529 = vmatprep.subr.mxu0 0.0
    %530 = vmatpush1.msra.mxu0 0.0
    %531 = vmatprep.subr.mxu0 0.0
    %532 = vmatpush1.msra.mxu0 0.0
    %533 = vmatprep.subr.mxu0 0.0
    %534 = vmatpush1.msra.mxu0 0.0
    %535 = vmatprep.subr.mxu0 0.0
    %536 = vmatpush1.msra.mxu0 0.0
    %537 = vmatprep.subr.mxu0 0.0
    %538 = vmatpush1.msra.mxu0 0.0
    %539 = vmatprep.subr.mxu0 0.0
    %540 = vmatpush1.msra.mxu0 0.0
    %541 = vmatprep.subr.mxu0 0.0
    %542 = vmatpush1.msra.mxu0 0.0
    %543 = vmatprep.subr.mxu0 0.0
    %544 = vmatpush1.msra.mxu0 0.0
    %545 = vmatprep.subr.mxu0 0.0
    %546 = vmatpush1.msra.mxu0 0.0
    %547 = vmatprep.subr.mxu0 0.0
    %548 = vmatpush1.msra.mxu0 0.0
    %549 = vmatprep.subr.mxu0 0.0
    %550 = vmatpush1.msra.mxu0 0.0
    %551 = vmatprep.subr.mxu0 0.0
    %552 = vmatpush1.msra.mxu0 0.0
    %553 = vmatprep.subr.mxu0 0.0
    %554 = vmatpush1.msra.mxu0 0.0
    %555 = vmatprep.subr.mxu0 0.0
    %556 = vmatpush1.msra.mxu0 %v413
    %557 = vmatprep.subr.mxu0 0.0
    %558 = vmatpush2.msra.mxu0 0.0
    %559 = vmatprep.subr.mxu0 0.0
    %560 = vmatpush2.msra.mxu0 0.0
    %561 = vmatprep.subr.mxu0 0.0
    %562 = vmatpush2.msra.mxu0 0.0
    %563 = vmatprep.subr.mxu0 0.0
    %564 = vmatpush2.msra.mxu0 0.0
    %565 = vmatprep.subr.mxu0 0.0
    %566 = vmatpush2.msra.mxu0 0.0
    %567 = vmatprep.subr.mxu0 0.0
    %568 = vmatpush2.msra.mxu0 0.0
    %569 = vmatprep.subr.mxu0 0.0
    %570 = vmatpush2.msra.mxu0 0.0
    %571 = vmatprep.subr.mxu0 0.0
    %572 = vmatpush2.msra.mxu0 0.0
    %573 = vmatprep.subr.mxu0 0.0
    %574 = vmatpush2.msra.mxu0 0.0
    %575 = vmatprep.subr.mxu0 0.0
    %576 = vmatpush2.msra.mxu0 0.0
    %577 = vmatprep.subr.mxu0 0.0
    %578 = vmatpush2.msra.mxu0 0.0
    %579 = vmatprep.subr.mxu0 0.0
    %580 = vmatpush2.msra.mxu0 0.0
    %581 = vmatprep.subr.mxu0 0.0
    %582 = vmatpush2.msra.mxu0 0.0
    %583 = vmatprep.subr.mxu0 0.0
    %584 = vmatpush2.msra.mxu0 0.0
    %585 = vmatprep.subr.mxu0 0.0
    %586 = vmatpush2.msra.mxu0 0.0
    %587 = vmatprep.subr.mxu0 0.0
    %588 = vmatpush2.msra.mxu0 0.0
    %589 = vmatprep.mubr.f32.mxu0 0.0
    %590 = vmatmul.mubr.f32.gmra.mxu0 %v514
    %v591 = vpop.f32.mrf.mxu0
    %v592 = vadd.f32 %v495, %v591
    %v593 = vpop.f32.mrf.mxu0
    %594 = vmatprep.mubr.f32.mxu0 0.0
    %595 = vmatmul.mubr.f32.gmra.mxu0 %v517
    %v596 = vpop.f32.mrf.mxu0
    %v597 = vadd.f32 %v500, %v596
    %v598 = vpop.f32.mrf.mxu0
    %599 = vmatprep.mubr.f32.mxu0 0.0
    %600 = vmatmul.mubr.f32.gmra.mxu0 %v520
    %v601 = vpop.f32.mrf.mxu0
    %v602 = vadd.f32 %v505, %v601
    %v603 = vpop.f32.mrf.mxu0
    %604 = vmatprep.mubr.f32.mxu0 0.0
    %605 = vmatmul.mubr.f32.gmra.mxu0 %v523
    %v606 = vpop.f32.mrf.mxu0
    %v607 = vadd.f32 %v510, %v606
    %v608 = vpop.f32.mrf.mxu0
    %609 = vdwg.mxu0
    %v610 = vld [vmem:[%s3 + $0x8] sm:$0xff]
    %v612 = vsel %vm415, %v335, 0
    %v615 = vsel %vm415, %v340, 0
    %v618 = vsel %vm415, %v345, 0
    %v621 = vsel %vm415, %v350, 0
    %623 = vmatprep.subr.mxu0 0.0
    %624 = vmatpush1.msra.mxu0 0.0
    %625 = vmatprep.subr.mxu0 0.0
    %626 = vmatpush1.msra.mxu0 0.0
    %627 = vmatprep.subr.mxu0 0.0
    %628 = vmatpush1.msra.mxu0 0.0
    %629 = vmatprep.subr.mxu0 0.0
    %630 = vmatpush1.msra.mxu0 0.0
    %631 = vmatprep.subr.mxu0 0.0
    %632 = vmatpush1.msra.mxu0 0.0
    %633 = vmatprep.subr.mxu0 0.0
    %634 = vmatpush1.msra.mxu0 0.0
    %635 = vmatprep.subr.mxu0 0.0
    %636 = vmatpush1.msra.mxu0 0.0
    %637 = vmatprep.subr.mxu0 0.0
    %638 = vmatpush1.msra.mxu0 0.0
    %639 = vmatprep.subr.mxu0 0.0
    %640 = vmatpush1.msra.mxu0 0.0
    %641 = vmatprep.subr.mxu0 0.0
    %642 = vmatpush1.msra.mxu0 0.0
    %643 = vmatprep.subr.mxu0 0.0
    %644 = vmatpush1.msra.mxu0 0.0
    %645 = vmatprep.subr.mxu0 0.0
    %646 = vmatpush1.msra.mxu0 0.0
    %647 = vmatprep.subr.mxu0 0.0
    %648 = vmatpush1.msra.mxu0 0.0
    %649 = vmatprep.subr.mxu0 0.0
    %650 = vmatpush1.msra.mxu0 0.0
    %651 = vmatprep.subr.mxu0 0.0
    %652 = vmatpush1.msra.mxu0 0.0
    %653 = vmatprep.subr.mxu0 0.0
    %654 = vmatpush1.msra.mxu0 %v610
    %655 = vmatprep.subr.mxu0 0.0
    %656 = vmatpush2.msra.mxu0 0.0
    %657 = vmatprep.subr.mxu0 0.0
    %658 = vmatpush2.msra.mxu0 0.0
    %659 = vmatprep.subr.mxu0 0.0
    %660 = vmatpush2.msra.mxu0 0.0
    %661 = vmatprep.subr.mxu0 0.0
    %662 = vmatpush2.msra.mxu0 0.0
    %663 = vmatprep.subr.mxu0 0.0
    %664 = vmatpush2.msra.mxu0 0.0
    %665 = vmatprep.subr.mxu0 0.0
    %666 = vmatpush2.msra.mxu0 0.0
    %667 = vmatprep.subr.mxu0 0.0
    %668 = vmatpush2.msra.mxu0 0.0
    %669 = vmatprep.subr.mxu0 0.0
    %670 = vmatpush2.msra.mxu0 0.0
    %671 = vmatprep.subr.mxu0 0.0
    %672 = vmatpush2.msra.mxu0 0.0
    %673 = vmatprep.subr.mxu0 0.0
    %674 = vmatpush2.msra.mxu0 0.0
    %675 = vmatprep.subr.mxu0 0.0
    %676 = vmatpush2.msra.mxu0 0.0
    %677 = vmatprep.subr.mxu0 0.0
    %678 = vmatpush2.msra.mxu0 0.0
    %679 = vmatprep.subr.mxu0 0.0
    %680 = vmatpush2.msra.mxu0 0.0
    %681 = vmatprep.subr.mxu0 0.0
    %682 = vmatpush2.msra.mxu0 0.0
    %683 = vmatprep.subr.mxu0 0.0
    %684 = vmatpush2.msra.mxu0 0.0
    %685 = vmatprep.subr.mxu0 0.0
    %686 = vmatpush2.msra.mxu0 0.0
    %687 = vmatprep.mubr.f32.mxu0 0.0
    %688 = vmatmul.mubr.f32.gmra.mxu0 %v612
    %v689 = vpop.f32.mrf.mxu0
    %v690 = vadd.f32 0.0, %v689
    %v691 = vpop.f32.mrf.mxu0
    %692 = vmatprep.mubr.f32.mxu0 0.0
    %693 = vmatmul.mubr.f32.gmra.mxu0 %v615
    %v694 = vpop.f32.mrf.mxu0
    %v695 = vadd.f32 0.0, %v694
    %v696 = vpop.f32.mrf.mxu0
    %697 = vmatprep.mubr.f32.mxu0 0.0
    %698 = vmatmul.mubr.f32.gmra.mxu0 %v618
    %v699 = vpop.f32.mrf.mxu0
    %v700 = vadd.f32 0.0, %v699
    %v701 = vpop.f32.mrf.mxu0
    %702 = vmatprep.mubr.f32.mxu0 0.0
    %703 = vmatmul.mubr.f32.gmra.mxu0 %v621
    %v704 = vpop.f32.mrf.mxu0
    %v705 = vadd.f32 0.0, %v704
    %v706 = vpop.f32.mrf.mxu0
    %707 = vdwg.mxu0
    %v708 = vadd.f32 %v592, %v690
    %v709 = vadd.f32 %v597, %v695
    %v710 = vadd.f32 %v602, %v700
    %v711 = vadd.f32 %v607, %v705
    %v712 = vld [vmem:[%s3 + $0x10] sm:$0xff]
    %v714 = vsel %vm415, %v355, 0
    %v717 = vsel %vm415, %v360, 0
    %v720 = vsel %vm415, %v365, 0
    %v723 = vsel %vm415, %v370, 0
    %725 = vmatprep.subr.mxu0 0.0
    %726 = vmatpush1.msra.mxu0 0.0
    %727 = vmatprep.subr.mxu0 0.0
    %728 = vmatpush1.msra.mxu0 0.0
    %729 = vmatprep.subr.mxu0 0.0
    %730 = vmatpush1.msra.mxu0 0.0
    %731 = vmatprep.subr.mxu0 0.0
    %732 = vmatpush1.msra.mxu0 0.0
    %733 = vmatprep.subr.mxu0 0.0
    %734 = vmatpush1.msra.mxu0 0.0
    %735 = vmatprep.subr.mxu0 0.0
    %736 = vmatpush1.msra.mxu0 0.0
    %737 = vmatprep.subr.mxu0 0.0
    %738 = vmatpush1.msra.mxu0 0.0
    %739 = vmatprep.subr.mxu0 0.0
    %740 = vmatpush1.msra.mxu0 0.0
    %741 = vmatprep.subr.mxu0 0.0
    %742 = vmatpush1.msra.mxu0 0.0
    %743 = vmatprep.subr.mxu0 0.0
    %744 = vmatpush1.msra.mxu0 0.0
    %745 = vmatprep.subr.mxu0 0.0
    %746 = vmatpush1.msra.mxu0 0.0
    %747 = vmatprep.subr.mxu0 0.0
    %748 = vmatpush1.msra.mxu0 0.0
    %749 = vmatprep.subr.mxu0 0.0
    %750 = vmatpush1.msra.mxu0 0.0
    %751 = vmatprep.subr.mxu0 0.0
    %752 = vmatpush1.msra.mxu0 0.0
    %753 = vmatprep.subr.mxu0 0.0
    %754 = vmatpush1.msra.mxu0 0.0
    %755 = vmatprep.subr.mxu0 0.0
    %756 = vmatpush1.msra.mxu0 %v712
    %757 = vmatprep.subr.mxu0 0.0
    %758 = vmatpush2.msra.mxu0 0.0
    %759 = vmatprep.subr.mxu0 0.0
    %760 = vmatpush2.msra.mxu0 0.0
    %761 = vmatprep.subr.mxu0 0.0
    %762 = vmatpush2.msra.mxu0 0.0
    %763 = vmatprep.subr.mxu0 0.0
    %764 = vmatpush2.msra.mxu0 0.0
    %765 = vmatprep.subr.mxu0 0.0
    %766 = vmatpush2.msra.mxu0 0.0
    %767 = vmatprep.subr.mxu0 0.0
    %768 = vmatpush2.msra.mxu0 0.0
    %769 = vmatprep.subr.mxu0 0.0
    %770 = vmatpush2.msra.mxu0 0.0
    %771 = vmatprep.subr.mxu0 0.0
    %772 = vmatpush2.msra.mxu0 0.0
    %773 = vmatprep.subr.mxu0 0.0
    %774 = vmatpush2.msra.mxu0 0.0
    %775 = vmatprep.subr.mxu0 0.0
    %776 = vmatpush2.msra.mxu0 0.0
    %777 = vmatprep.subr.mxu0 0.0
    %778 = vmatpush2.msra.mxu0 0.0
    %779 = vmatprep.subr.mxu0 0.0
    %780 = vmatpush2.msra.mxu0 0.0
    %781 = vmatprep.subr.mxu0 0.0
    %782 = vmatpush2.msra.mxu0 0.0
    %783 = vmatprep.subr.mxu0 0.0
    %784 = vmatpush2.msra.mxu0 0.0
    %785 = vmatprep.subr.mxu0 0.0
    %786 = vmatpush2.msra.mxu0 0.0
    %787 = vmatprep.subr.mxu0 0.0
    %788 = vmatpush2.msra.mxu0 0.0
    %789 = vmatprep.mubr.f32.mxu0 0.0
    %790 = vmatmul.mubr.f32.gmra.mxu0 %v714
    %v791 = vpop.f32.mrf.mxu0
    %v792 = vadd.f32 0.0, %v791
    %v793 = vpop.f32.mrf.mxu0
    %794 = vmatprep.mubr.f32.mxu0 0.0
    %795 = vmatmul.mubr.f32.gmra.mxu0 %v717
    %v796 = vpop.f32.mrf.mxu0
    %v797 = vadd.f32 0.0, %v796
    %v798 = vpop.f32.mrf.mxu0
    %799 = vmatprep.mubr.f32.mxu0 0.0
    %800 = vmatmul.mubr.f32.gmra.mxu0 %v720
    %v801 = vpop.f32.mrf.mxu0
    %v802 = vadd.f32 0.0, %v801
    %v803 = vpop.f32.mrf.mxu0
    %804 = vmatprep.mubr.f32.mxu0 0.0
    %805 = vmatmul.mubr.f32.gmra.mxu0 %v723
    %v806 = vpop.f32.mrf.mxu0
    %v807 = vadd.f32 0.0, %v806
    %v808 = vpop.f32.mrf.mxu0
    %809 = vdwg.mxu0
    %v810 = vadd.f32 %v708, %v792
    %v811 = vadd.f32 %v709, %v797
    %v812 = vadd.f32 %v710, %v802
    %v813 = vadd.f32 %v711, %v807
    %v814 = vld [vmem:[%s3 + $0x18] sm:$0xff]
    %v816 = vsel %vm415, %v375, 0
    %v819 = vsel %vm415, %v380, 0
    %v822 = vsel %vm415, %v385, 0
    %v825 = vsel %vm415, %v390, 0
    %827 = vmatprep.subr.mxu0 0.0
    %828 = vmatpush1.msra.mxu0 0.0
    %829 = vmatprep.subr.mxu0 0.0
    %830 = vmatpush1.msra.mxu0 0.0
    %831 = vmatprep.subr.mxu0 0.0
    %832 = vmatpush1.msra.mxu0 0.0
    %833 = vmatprep.subr.mxu0 0.0
    %834 = vmatpush1.msra.mxu0 0.0
    %835 = vmatprep.subr.mxu0 0.0
    %836 = vmatpush1.msra.mxu0 0.0
    %837 = vmatprep.subr.mxu0 0.0
    %838 = vmatpush1.msra.mxu0 0.0
    %839 = vmatprep.subr.mxu0 0.0
    %840 = vmatpush1.msra.mxu0 0.0
    %841 = vmatprep.subr.mxu0 0.0
    %842 = vmatpush1.msra.mxu0 0.0
    %843 = vmatprep.subr.mxu0 0.0
    %844 = vmatpush1.msra.mxu0 0.0
    %845 = vmatprep.subr.mxu0 0.0
    %846 = vmatpush1.msra.mxu0 0.0
    %847 = vmatprep.subr.mxu0 0.0
    %848 = vmatpush1.msra.mxu0 0.0
    %849 = vmatprep.subr.mxu0 0.0
    %850 = vmatpush1.msra.mxu0 0.0
    %851 = vmatprep.subr.mxu0 0.0
    %852 = vmatpush1.msra.mxu0 0.0
    %853 = vmatprep.subr.mxu0 0.0
    %854 = vmatpush1.msra.mxu0 0.0
    %855 = vmatprep.subr.mxu0 0.0
    %856 = vmatpush1.msra.mxu0 0.0
    %857 = vmatprep.subr.mxu0 0.0
    %858 = vmatpush1.msra.mxu0 %v814
    %859 = vmatprep.subr.mxu0 0.0
    %860 = vmatpush2.msra.mxu0 0.0
    %861 = vmatprep.subr.mxu0 0.0
    %862 = vmatpush2.msra.mxu0 0.0
    %863 = vmatprep.subr.mxu0 0.0
    %864 = vmatpush2.msra.mxu0 0.0
    %865 = vmatprep.subr.mxu0 0.0
    %866 = vmatpush2.msra.mxu0 0.0
    %867 = vmatprep.subr.mxu0 0.0
    %868 = vmatpush2.msra.mxu0 0.0
    %869 = vmatprep.subr.mxu0 0.0
    %870 = vmatpush2.msra.mxu0 0.0
    %871 = vmatprep.subr.mxu0 0.0
    %872 = vmatpush2.msra.mxu0 0.0
    %873 = vmatprep.subr.mxu0 0.0
    %874 = vmatpush2.msra.mxu0 0.0
    %875 = vmatprep.subr.mxu0 0.0
    %876 = vmatpush2.msra.mxu0 0.0
    %877 = vmatprep.subr.mxu0 0.0
    %878 = vmatpush2.msra.mxu0 0.0
    %879 = vmatprep.subr.mxu0 0.0
    %880 = vmatpush2.msra.mxu0 0.0
    %881 = vmatprep.subr.mxu0 0.0
    %882 = vmatpush2.msra.mxu0 0.0
    %883 = vmatprep.subr.mxu0 0.0
    %884 = vmatpush2.msra.mxu0 0.0
    %885 = vmatprep.subr.mxu0 0.0
    %886 = vmatpush2.msra.mxu0 0.0
    %887 = vmatprep.subr.mxu0 0.0
    %888 = vmatpush2.msra.mxu0 0.0
    %889 = vmatprep.subr.mxu0 0.0
    %890 = vmatpush2.msra.mxu0 0.0
    %891 = vmatprep.mubr.f32.mxu0 0.0
    %892 = vmatmul.mubr.f32.gmra.mxu0 %v816
    %v893 = vpop.f32.mrf.mxu0
    %v894 = vadd.f32 0.0, %v893
    %v895 = vpop.f32.mrf.mxu0
    %896 = vmatprep.mubr.f32.mxu0 0.0
    %897 = vmatmul.mubr.f32.gmra.mxu0 %v819
    %v898 = vpop.f32.mrf.mxu0
    %v899 = vadd.f32 0.0, %v898
    %v900 = vpop.f32.mrf.mxu0
    %901 = vmatprep.mubr.f32.mxu0 0.0
    %902 = vmatmul.mubr.f32.gmra.mxu0 %v822
    %v903 = vpop.f32.mrf.mxu0
    %v904 = vadd.f32 0.0, %v903
    %v905 = vpop.f32.mrf.mxu0
    %906 = vmatprep.mubr.f32.mxu0 0.0
    %907 = vmatmul.mubr.f32.gmra.mxu0 %v825
    %v908 = vpop.f32.mrf.mxu0
    %v909 = vadd.f32 0.0, %v908
    %v910 = vpop.f32.mrf.mxu0
    %911 = vdwg.mxu0
    %v912 = vadd.f32 %v810, %v894
    %v913 = vadd.f32 %v811, %v899
    %v914 = vadd.f32 %v812, %v904
    %v915 = vadd.f32 %v813, %v909
    %v916 = vld [vmem:[%s3 + $0x20] sm:$0xff]
    %v918 = vsel %vm415, %v395, 0
    %v921 = vsel %vm415, %v400, 0
    %v924 = vsel %vm415, %v405, 0
    %v927 = vsel %vm415, %v410, 0
    %929 = vmatprep.subr.mxu0 0.0
    %930 = vmatpush1.msra.mxu0 0.0
    %931 = vmatprep.subr.mxu0 0.0
    %932 = vmatpush1.msra.mxu0 0.0
    %933 = vmatprep.subr.mxu0 0.0
    %934 = vmatpush1.msra.mxu0 0.0
    %935 = vmatprep.subr.mxu0 0.0
    %936 = vmatpush1.msra.mxu0 0.0
    %937 = vmatprep.subr.mxu0 0.0
    %938 = vmatpush1.msra.mxu0 0.0
    %939 = vmatprep.subr.mxu0 0.0
    %940 = vmatpush1.msra.mxu0 0.0
    %941 = vmatprep.subr.mxu0 0.0
    %942 = vmatpush1.msra.mxu0 0.0
    %943 = vmatprep.subr.mxu0 0.0
    %944 = vmatpush1.msra.mxu0 0.0
    %945 = vmatprep.subr.mxu0 0.0
    %946 = vmatpush1.msra.mxu0 0.0
    %947 = vmatprep.subr.mxu0 0.0
    %948 = vmatpush1.msra.mxu0 0.0
    %949 = vmatprep.subr.mxu0 0.0
    %950 = vmatpush1.msra.mxu0 0.0
    %951 = vmatprep.subr.mxu0 0.0
    %952 = vmatpush1.msra.mxu0 0.0
    %953 = vmatprep.subr.mxu0 0.0
    %954 = vmatpush1.msra.mxu0 0.0
    %955 = vmatprep.subr.mxu0 0.0
    %956 = vmatpush1.msra.mxu0 0.0
    %957 = vmatprep.subr.mxu0 0.0
    %958 = vmatpush1.msra.mxu0 0.0
    %959 = vmatprep.subr.mxu0 0.0
    %960 = vmatpush1.msra.mxu0 %v916
    %961 = vmatprep.subr.mxu0 0.0
    %962 = vmatpush2.msra.mxu0 0.0
    %963 = vmatprep.subr.mxu0 0.0
    %964 = vmatpush2.msra.mxu0 0.0
    %965 = vmatprep.subr.mxu0 0.0
    %966 = vmatpush2.msra.mxu0 0.0
    %967 = vmatprep.subr.mxu0 0.0
    %968 = vmatpush2.msra.mxu0 0.0
    %969 = vmatprep.subr.mxu0 0.0
    %970 = vmatpush2.msra.mxu0 0.0
    %971 = vmatprep.subr.mxu0 0.0
    %972 = vmatpush2.msra.mxu0 0.0
    %973 = vmatprep.subr.mxu0 0.0
    %974 = vmatpush2.msra.mxu0 0.0
    %975 = vmatprep.subr.mxu0 0.0
    %976 = vmatpush2.msra.mxu0 0.0
    %977 = vmatprep.subr.mxu0 0.0
    %978 = vmatpush2.msra.mxu0 0.0
    %979 = vmatprep.subr.mxu0 0.0
    %980 = vmatpush2.msra.mxu0 0.0
    %981 = vmatprep.subr.mxu0 0.0
    %982 = vmatpush2.msra.mxu0 0.0
    %983 = vmatprep.subr.mxu0 0.0
    %984 = vmatpush2.msra.mxu0 0.0
    %985 = vmatprep.subr.mxu0 0.0
    %986 = vmatpush2.msra.mxu0 0.0
    %987 = vmatprep.subr.mxu0 0.0
    %988 = vmatpush2.msra.mxu0 0.0
    %989 = vmatprep.subr.mxu0 0.0
    %990 = vmatpush2.msra.mxu0 0.0
    %991 = vmatprep.subr.mxu0 0.0
    %992 = vmatpush2.msra.mxu0 0.0
    %993 = vmatprep.mubr.f32.mxu0 0.0
    %994 = vmatmul.mubr.f32.gmra.mxu0 %v918
    %v995 = vpop.f32.mrf.mxu0
    %v996 = vadd.f32 0.0, %v995
    %v997 = vpop.f32.mrf.mxu0
    %998 = vmatprep.mubr.f32.mxu0 0.0
    %999 = vmatmul.mubr.f32.gmra.mxu0 %v921
    %v1000 = vpop.f32.mrf.mxu0
    %v1001 = vadd.f32 0.0, %v1000
    %v1002 = vpop.f32.mrf.mxu0
    %1003 = vmatprep.mubr.f32.mxu0 0.0
    %1004 = vmatmul.mubr.f32.gmra.mxu0 %v924
    %v1005 = vpop.f32.mrf.mxu0
    %v1006 = vadd.f32 0.0, %v1005
    %v1007 = vpop.f32.mrf.mxu0
    %1008 = vmatprep.mubr.f32.mxu0 0.0
    %1009 = vmatmul.mubr.f32.gmra.mxu0 %v927
    %v1010 = vpop.f32.mrf.mxu0
    %v1011 = vadd.f32 0.0, %v1010
    %v1012 = vpop.f32.mrf.mxu0
    %1013 = vdwg.mxu0
    %v1014 = vadd.f32 %v912, %v996
    %v1015 = vadd.f32 %v913, %v1001
    %v1016 = vadd.f32 %v914, %v1006
    %v1017 = vadd.f32 %v915, %v1011
    %v1018 = vld [vmem:[%s4] sm:$0x1]
    %v1020 = vlaneseq
    %v1021 = vshrl.u32 %v1020, 7
    %v1022 = vsub.s32 0, %v1021
    %v1023 = vrot.slane %v1018, %v1022
    %v1025 = vadd.f32 %v1014, %v1023
    %v1026 = vadd.f32 %v1015, %v1023
    %v1027 = vadd.f32 %v1016, %v1023
    %v1028 = vadd.f32 %v1017, %v1023
    %v1029 = vmax.f32 %v1025, 0.0
    %v1030 = vmax.f32 %v1026, 0.0
    %v1031 = vmax.f32 %v1027, 0.0
    %v1032 = vmax.f32 %v1028, 0.0
    %1033 = vmatprep.subr.mxu0 0.0
    %1034 = vmatpush1.msra.mxu0 0.0
    %1035 = vmatprep.subr.mxu0 0.0
    %1036 = vmatpush1.msra.mxu0 0.0
    %1037 = vmatprep.subr.mxu0 0.0
    %1038 = vmatpush1.msra.mxu0 0.0
    %1039 = vmatprep.subr.mxu0 0.0
    %1040 = vmatpush1.msra.mxu0 0.0
    %1041 = vmatprep.subr.mxu0 0.0
    %1042 = vmatpush1.msra.mxu0 0.0
    %1043 = vmatprep.subr.mxu0 0.0
    %1044 = vmatpush1.msra.mxu0 0.0
    %1045 = vmatprep.subr.mxu0 0.0
    %1046 = vmatpush1.msra.mxu0 0.0
    %1047 = vmatprep.subr.mxu0 0.0
    %1048 = vmatpush1.msra.mxu0 0.0
    %1049 = vmatprep.subr.mxu0 0.0
    %1050 = vmatpush1.msra.mxu0 0.0
    %1051 = vmatprep.subr.mxu0 0.0
    %1052 = vmatpush1.msra.mxu0 0.0
    %1053 = vmatprep.subr.mxu0 0.0
    %1054 = vmatpush1.msra.mxu0 0.0
    %1055 = vmatprep.subr.mxu0 0.0
    %1056 = vmatpush1.msra.mxu0 0.0
    %1057 = vmatprep.subr.mxu0 0.0
    %1058 = vmatpush1.msra.mxu0 %v1032
    %1059 = vmatprep.subr.mxu0 0.0
    %1060 = vmatpush1.msra.mxu0 %v1031
    %1061 = vmatprep.subr.mxu0 0.0
    %1062 = vmatpush1.msra.mxu0 %v1030
    %1063 = vmatprep.subr.mxu0 0.0
    %1064 = vmatpush1.msra.mxu0 %v1029
    %1065 = vmatprep.subr.mxu0 0.0
    %1066 = vmatpush2.msra.mxu0 0.0
    %1067 = vmatprep.subr.mxu0 0.0
    %1068 = vmatpush2.msra.mxu0 0.0
    %1069 = vmatprep.subr.mxu0 0.0
    %1070 = vmatpush2.msra.mxu0 0.0
    %1071 = vmatprep.subr.mxu0 0.0
    %1072 = vmatpush2.msra.mxu0 0.0
    %1073 = vmatprep.subr.mxu0 0.0
    %1074 = vmatpush2.msra.mxu0 0.0
    %1075 = vmatprep.subr.mxu0 0.0
    %1076 = vmatpush2.msra.mxu0 0.0
    %1077 = vmatprep.subr.mxu0 0.0
    %1078 = vmatpush2.msra.mxu0 0.0
    %1079 = vmatprep.subr.mxu0 0.0
    %1080 = vmatpush2.msra.mxu0 0.0
    %1081 = vmatprep.subr.mxu0 0.0
    %1082 = vmatpush2.msra.mxu0 0.0
    %1083 = vmatprep.subr.mxu0 0.0
    %1084 = vmatpush2.msra.mxu0 0.0
    %1085 = vmatprep.subr.mxu0 0.0
    %1086 = vmatpush2.msra.mxu0 0.0
    %1087 = vmatprep.subr.mxu0 0.0
    %1088 = vmatpush2.msra.mxu0 0.0
    %1089 = vmatprep.subr.mxu0 0.0
    %1090 = vmatpush2.msra.mxu0 0.0
    %1091 = vmatprep.subr.mxu0 0.0
    %1092 = vmatpush2.msra.mxu0 0.0
    %1093 = vmatprep.subr.mxu0 0.0
    %1094 = vmatpush2.msra.mxu0 0.0
    %1095 = vmatprep.subr.mxu0 0.0
    %1096 = vmatpush2.msra.mxu0 0.0
    %1097 = vmatprep.mubr.f32.mxu0 0.0
    %1098 = vmatmul.mubr.f32.gmra.mxu0 %v189
    %v1099 = vpop.f32.mrf.mxu0
    %v1100 = vadd.f32 0.0, %v1099
    %v1101 = vpop.f32.mrf.mxu0
    %1102 = vmatprep.mubr.f32.mxu0 0.0
    %1103 = vmatmul.mubr.f32.gmra.mxu0 %v192
    %v1104 = vpop.f32.mrf.mxu0
    %v1105 = vadd.f32 0.0, %v1104
    %v1106 = vpop.f32.mrf.mxu0
    %1107 = vmatprep.mubr.f32.mxu0 0.0
    %1108 = vmatmul.mubr.f32.gmra.mxu0 %v195
    %v1109 = vpop.f32.mrf.mxu0
    %v1110 = vadd.f32 0.0, %v1109
    %v1111 = vpop.f32.mrf.mxu0
    %1112 = vmatprep.mubr.f32.mxu0 0.0
    %1113 = vmatmul.mubr.f32.gmra.mxu0 %v198
    %v1114 = vpop.f32.mrf.mxu0
    %v1115 = vadd.f32 0.0, %v1114
    %v1116 = vpop.f32.mrf.mxu0
    %1117 = vmatprep.mubr.f32.mxu0 0.0
    %1118 = vmatmul.mubr.f32.gmra.mxu0 %v201
    %v1119 = vpop.f32.mrf.mxu0
    %v1120 = vadd.f32 0.0, %v1119
    %v1121 = vpop.f32.mrf.mxu0
    %1122 = vmatprep.mubr.f32.mxu0 0.0
    %1123 = vmatmul.mubr.f32.gmra.mxu0 %v204
    %v1124 = vpop.f32.mrf.mxu0
    %v1125 = vadd.f32 0.0, %v1124
    %v1126 = vpop.f32.mrf.mxu0
    %1127 = vmatprep.mubr.f32.mxu0 0.0
    %1128 = vmatmul.mubr.f32.gmra.mxu0 %v207
    %v1129 = vpop.f32.mrf.mxu0
    %v1130 = vadd.f32 0.0, %v1129
    %v1131 = vpop.f32.mrf.mxu0
    %1132 = vmatprep.mubr.f32.mxu0 0.0
    %1133 = vmatmul.mubr.f32.gmra.mxu0 %v210
    %v1134 = vpop.f32.mrf.mxu0
    %v1135 = vadd.f32 0.0, %v1134
    %v1136 = vpop.f32.mrf.mxu0
    %1137 = vmatprep.mubr.f32.mxu0 0.0
    %1138 = vmatmul.mubr.f32.gmra.mxu0 %v213
    %v1139 = vpop.f32.mrf.mxu0
    %v1140 = vadd.f32 0.0, %v1139
    %v1141 = vpop.f32.mrf.mxu0
    %1142 = vmatprep.mubr.f32.mxu0 0.0
    %1143 = vmatmul.mubr.f32.gmra.mxu0 %v216
    %v1144 = vpop.f32.mrf.mxu0
    %v1145 = vadd.f32 0.0, %v1144
    %v1146 = vpop.f32.mrf.mxu0
    %1147 = vmatprep.mubr.f32.mxu0 0.0
    %1148 = vmatmul.mubr.f32.gmra.mxu0 %v219
    %v1149 = vpop.f32.mrf.mxu0
    %v1150 = vadd.f32 0.0, %v1149
    %v1151 = vpop.f32.mrf.mxu0
    %1152 = vmatprep.mubr.f32.mxu0 0.0
    %1153 = vmatmul.mubr.f32.gmra.mxu0 %v222
    %v1154 = vpop.f32.mrf.mxu0
    %v1155 = vadd.f32 0.0, %v1154
    %v1156 = vpop.f32.mrf.mxu0
    %1157 = vmatprep.mubr.f32.mxu0 0.0
    %1158 = vmatmul.mubr.f32.gmra.mxu0 %v225
    %v1159 = vpop.f32.mrf.mxu0
    %v1160 = vadd.f32 0.0, %v1159
    %v1161 = vpop.f32.mrf.mxu0
    %1162 = vmatprep.mubr.f32.mxu0 0.0
    %1163 = vmatmul.mubr.f32.gmra.mxu0 %v228
    %v1164 = vpop.f32.mrf.mxu0
    %v1165 = vadd.f32 0.0, %v1164
    %v1166 = vpop.f32.mrf.mxu0
    %1167 = vmatprep.mubr.f32.mxu0 0.0
    %1168 = vmatmul.mubr.f32.gmra.mxu0 %v231
    %v1169 = vpop.f32.mrf.mxu0
    %v1170 = vadd.f32 0.0, %v1169
    %v1171 = vpop.f32.mrf.mxu0
    %1172 = vmatprep.mubr.f32.mxu0 0.0
    %1173 = vmatmul.mubr.f32.gmra.mxu0 %v234
    %v1174 = vpop.f32.mrf.mxu0
    %v1175 = vadd.f32 0.0, %v1174
    %v1176 = vpop.f32.mrf.mxu0
    %1177 = vmatprep.mubr.f32.mxu0 0.0
    %1178 = vmatmul.mubr.f32.gmra.mxu0 %v237
    %v1179 = vpop.f32.mrf.mxu0
    %v1180 = vadd.f32 0.0, %v1179
    %v1181 = vpop.f32.mrf.mxu0
    %1182 = vmatprep.mubr.f32.mxu0 0.0
    %1183 = vmatmul.mubr.f32.gmra.mxu0 %v240
    %v1184 = vpop.f32.mrf.mxu0
    %v1185 = vadd.f32 0.0, %v1184
    %v1186 = vpop.f32.mrf.mxu0
    %1187 = vmatprep.mubr.f32.mxu0 0.0
    %1188 = vmatmul.mubr.f32.gmra.mxu0 %v243
    %v1189 = vpop.f32.mrf.mxu0
    %v1190 = vadd.f32 0.0, %v1189
    %v1191 = vpop.f32.mrf.mxu0
    %1192 = vmatprep.mubr.f32.mxu0 0.0
    %1193 = vmatmul.mubr.f32.gmra.mxu0 %v246
    %v1194 = vpop.f32.mrf.mxu0
    %v1195 = vadd.f32 0.0, %v1194
    %v1196 = vpop.f32.mrf.mxu0
    %1197 = vdwg.mxu0
    %v1198 = vld [vmem:[%s5 + $0xa0] sm:$0xff]
    %v1199 = vld [vmem:[%s5 + $0xa8] sm:$0xff]
    %v1200 = vld [vmem:[%s5 + $0xb0] sm:$0xff]
    %v1201 = vld [vmem:[%s5 + $0xb8] sm:$0xff]
    %v1202 = vld [vmem:[%s5] sm:$0xff]
    %v1203 = vld [vmem:[%s5 + $0x8] sm:$0xff]
    %v1204 = vld [vmem:[%s5 + $0x10] sm:$0xff]
    %v1205 = vld [vmem:[%s5 + $0x18] sm:$0xff]
    %v1207 = vsel %vm187, %v1100, 0
    %v1210 = vsel %vm187, %v1105, 0
    %v1213 = vsel %vm187, %v1110, 0
    %v1216 = vsel %vm187, %v1115, 0
    %1218 = vmatprep.subr.mxu0 0.0
    %1219 = vmatpush1.msra.mxu0 0.0
    %1220 = vmatprep.subr.mxu0 0.0
    %1221 = vmatpush1.msra.mxu0 0.0
    %1222 = vmatprep.subr.mxu0 0.0
    %1223 = vmatpush1.msra.mxu0 0.0
    %1224 = vmatprep.subr.mxu0 0.0
    %1225 = vmatpush1.msra.mxu0 0.0
    %1226 = vmatprep.subr.mxu0 0.0
    %1227 = vmatpush1.msra.mxu0 0.0
    %1228 = vmatprep.subr.mxu0 0.0
    %1229 = vmatpush1.msra.mxu0 0.0
    %1230 = vmatprep.subr.mxu0 0.0
    %1231 = vmatpush1.msra.mxu0 0.0
    %1232 = vmatprep.subr.mxu0 0.0
    %1233 = vmatpush1.msra.mxu0 0.0
    %1234 = vmatprep.subr.mxu0 0.0
    %1235 = vmatpush1.msra.mxu0 0.0
    %1236 = vmatprep.subr.mxu0 0.0
    %1237 = vmatpush1.msra.mxu0 0.0
    %1238 = vmatprep.subr.mxu0 0.0
    %1239 = vmatpush1.msra.mxu0 0.0
    %1240 = vmatprep.subr.mxu0 0.0
    %1241 = vmatpush1.msra.mxu0 0.0
    %1242 = vmatprep.subr.mxu0 0.0
    %1243 = vmatpush1.msra.mxu0 %v1205
    %1244 = vmatprep.subr.mxu0 0.0
    %1245 = vmatpush1.msra.mxu0 %v1204
    %1246 = vmatprep.subr.mxu0 0.0
    %1247 = vmatpush1.msra.mxu0 %v1203
    %1248 = vmatprep.subr.mxu0 0.0
    %1249 = vmatpush1.msra.mxu0 %v1202
    %1250 = vmatprep.subr.mxu0 0.0
    %1251 = vmatpush2.msra.mxu0 0.0
    %1252 = vmatprep.subr.mxu0 0.0
    %1253 = vmatpush2.msra.mxu0 0.0
    %1254 = vmatprep.subr.mxu0 0.0
    %1255 = vmatpush2.msra.mxu0 0.0
    %1256 = vmatprep.subr.mxu0 0.0
    %1257 = vmatpush2.msra.mxu0 0.0
    %1258 = vmatprep.subr.mxu0 0.0
    %1259 = vmatpush2.msra.mxu0 0.0
    %1260 = vmatprep.subr.mxu0 0.0
    %1261 = vmatpush2.msra.mxu0 0.0
    %1262 = vmatprep.subr.mxu0 0.0
    %1263 = vmatpush2.msra.mxu0 0.0
    %1264 = vmatprep.subr.mxu0 0.0
    %1265 = vmatpush2.msra.mxu0 0.0
    %1266 = vmatprep.subr.mxu0 0.0
    %1267 = vmatpush2.msra.mxu0 0.0
    %1268 = vmatprep.subr.mxu0 0.0
    %1269 = vmatpush2.msra.mxu0 0.0
    %1270 = vmatprep.subr.mxu0 0.0
    %1271 = vmatpush2.msra.mxu0 0.0
    %1272 = vmatprep.subr.mxu0 0.0
    %1273 = vmatpush2.msra.mxu0 0.0
    %1274 = vmatprep.subr.mxu0 0.0
    %1275 = vmatpush2.msra.mxu0 0.0
    %1276 = vmatprep.subr.mxu0 0.0
    %1277 = vmatpush2.msra.mxu0 0.0
    %1278 = vmatprep.subr.mxu0 0.0
    %1279 = vmatpush2.msra.mxu0 0.0
    %1280 = vmatprep.subr.mxu0 0.0
    %1281 = vmatpush2.msra.mxu0 0.0
    %1282 = vmatprep.mubr.f32.mxu0 0.0
    %1283 = vmatmul.mubr.f32.gmra.mxu0 %v1207
    %v1284 = vpop.f32.mrf.mxu0
    %v1285 = vadd.f32 0.0, %v1284
    %v1286 = vpop.f32.mrf.mxu0
    %1287 = vmatprep.mubr.f32.mxu0 0.0
    %1288 = vmatmul.mubr.f32.gmra.mxu0 %v1210
    %v1289 = vpop.f32.mrf.mxu0
    %v1290 = vadd.f32 0.0, %v1289
    %v1291 = vpop.f32.mrf.mxu0
    %1292 = vmatprep.mubr.f32.mxu0 0.0
    %1293 = vmatmul.mubr.f32.gmra.mxu0 %v1213
    %v1294 = vpop.f32.mrf.mxu0
    %v1295 = vadd.f32 0.0, %v1294
    %v1296 = vpop.f32.mrf.mxu0
    %1297 = vmatprep.mubr.f32.mxu0 0.0
    %1298 = vmatmul.mubr.f32.gmra.mxu0 %v1216
    %v1299 = vpop.f32.mrf.mxu0
    %v1300 = vadd.f32 0.0, %v1299
    %v1301 = vpop.f32.mrf.mxu0
    %1302 = vdwg.mxu0
    %v1304 = vsel %vm187, %v1029, 0
    %v1307 = vsel %vm187, %v1030, 0
    %v1310 = vsel %vm187, %v1031, 0
    %v1313 = vsel %vm187, %v1032, 0
    %1315 = vmatprep.subr.mxu0 0.0
    %1316 = vmatpush1.msra.mxu0 0.0
    %1317 = vmatprep.subr.mxu0 0.0
    %1318 = vmatpush1.msra.mxu0 0.0
    %1319 = vmatprep.subr.mxu0 0.0
    %1320 = vmatpush1.msra.mxu0 0.0
    %1321 = vmatprep.subr.mxu0 0.0
    %1322 = vmatpush1.msra.mxu0 0.0
    %1323 = vmatprep.subr.mxu0 0.0
    %1324 = vmatpush1.msra.mxu0 0.0
    %1325 = vmatprep.subr.mxu0 0.0
    %1326 = vmatpush1.msra.mxu0 0.0
    %1327 = vmatprep.subr.mxu0 0.0
    %1328 = vmatpush1.msra.mxu0 0.0
    %1329 = vmatprep.subr.mxu0 0.0
    %1330 = vmatpush1.msra.mxu0 0.0
    %1331 = vmatprep.subr.mxu0 0.0
    %1332 = vmatpush1.msra.mxu0 0.0
    %1333 = vmatprep.subr.mxu0 0.0
    %1334 = vmatpush1.msra.mxu0 0.0
    %1335 = vmatprep.subr.mxu0 0.0
    %1336 = vmatpush1.msra.mxu0 0.0
    %1337 = vmatprep.subr.mxu0 0.0
    %1338 = vmatpush1.msra.mxu0 0.0
    %1339 = vmatprep.subr.mxu0 0.0
    %1340 = vmatpush1.msra.mxu0 %v1201
    %1341 = vmatprep.subr.mxu0 0.0
    %1342 = vmatpush1.msra.mxu0 %v1200
    %1343 = vmatprep.subr.mxu0 0.0
    %1344 = vmatpush1.msra.mxu0 %v1199
    %1345 = vmatprep.subr.mxu0 0.0
    %1346 = vmatpush1.msra.mxu0 %v1198
    %1347 = vmatprep.subr.mxu0 0.0
    %1348 = vmatpush2.msra.mxu0 0.0
    %1349 = vmatprep.subr.mxu0 0.0
    %1350 = vmatpush2.msra.mxu0 0.0
    %1351 = vmatprep.subr.mxu0 0.0
    %1352 = vmatpush2.msra.mxu0 0.0
    %1353 = vmatprep.subr.mxu0 0.0
    %1354 = vmatpush2.msra.mxu0 0.0
    %1355 = vmatprep.subr.mxu0 0.0
    %1356 = vmatpush2.msra.mxu0 0.0
    %1357 = vmatprep.subr.mxu0 0.0
    %1358 = vmatpush2.msra.mxu0 0.0
    %1359 = vmatprep.subr.mxu0 0.0
    %1360 = vmatpush2.msra.mxu0 0.0
    %1361 = vmatprep.subr.mxu0 0.0
    %1362 = vmatpush2.msra.mxu0 0.0
    %1363 = vmatprep.subr.mxu0 0.0
    %1364 = vmatpush2.msra.mxu0 0.0
    %1365 = vmatprep.subr.mxu0 0.0
    %1366 = vmatpush2.msra.mxu0 0.0
    %1367 = vmatprep.subr.mxu0 0.0
    %1368 = vmatpush2.msra.mxu0 0.0
    %1369 = vmatprep.subr.mxu0 0.0
    %1370 = vmatpush2.msra.mxu0 0.0
    %1371 = vmatprep.subr.mxu0 0.0
    %1372 = vmatpush2.msra.mxu0 0.0
    %1373 = vmatprep.subr.mxu0 0.0
    %1374 = vmatpush2.msra.mxu0 0.0
    %1375 = vmatprep.subr.mxu0 0.0
    %1376 = vmatpush2.msra.mxu0 0.0
    %1377 = vmatprep.subr.mxu0 0.0
    %1378 = vmatpush2.msra.mxu0 0.0
    %1379 = vmatprep.mubr.f32.mxu0 0.0
    %1380 = vmatmul.mubr.f32.gmra.mxu0 %v1304
    %v1381 = vpop.f32.mrf.mxu0
    %v1382 = vadd.f32 %v1285, %v1381
    %v1383 = vpop.f32.mrf.mxu0
    %1384 = vmatprep.mubr.f32.mxu0 0.0
    %1385 = vmatmul.mubr.f32.gmra.mxu0 %v1307
    %v1386 = vpop.f32.mrf.mxu0
    %v1387 = vadd.f32 %v1290, %v1386
    %v1388 = vpop.f32.mrf.mxu0
    %1389 = vmatprep.mubr.f32.mxu0 0.0
    %1390 = vmatmul.mubr.f32.gmra.mxu0 %v1310
    %v1391 = vpop.f32.mrf.mxu0
    %v1392 = vadd.f32 %v1295, %v1391
    %v1393 = vpop.f32.mrf.mxu0
    %1394 = vmatprep.mubr.f32.mxu0 0.0
    %1395 = vmatmul.mubr.f32.gmra.mxu0 %v1313
    %v1396 = vpop.f32.mrf.mxu0
    %v1397 = vadd.f32 %v1300, %v1396
    %v1398 = vpop.f32.mrf.mxu0
    %1399 = vdwg.mxu0
    %v1400 = vld [vmem:[%s5 + $0x20] sm:$0xff]
    %v1401 = vld [vmem:[%s5 + $0x28] sm:$0xff]
    %v1402 = vld [vmem:[%s5 + $0x30] sm:$0xff]
    %v1403 = vld [vmem:[%s5 + $0x38] sm:$0xff]
    %v1405 = vsel %vm187, %v1120, 0
    %v1408 = vsel %vm187, %v1125, 0
    %v1411 = vsel %vm187, %v1130, 0
    %v1414 = vsel %vm187, %v1135, 0
    %1416 = vmatprep.subr.mxu0 0.0
    %1417 = vmatpush1.msra.mxu0 0.0
    %1418 = vmatprep.subr.mxu0 0.0
    %1419 = vmatpush1.msra.mxu0 0.0
    %1420 = vmatprep.subr.mxu0 0.0
    %1421 = vmatpush1.msra.mxu0 0.0
    %1422 = vmatprep.subr.mxu0 0.0
    %1423 = vmatpush1.msra.mxu0 0.0
    %1424 = vmatprep.subr.mxu0 0.0
    %1425 = vmatpush1.msra.mxu0 0.0
    %1426 = vmatprep.subr.mxu0 0.0
    %1427 = vmatpush1.msra.mxu0 0.0
    %1428 = vmatprep.subr.mxu0 0.0
    %1429 = vmatpush1.msra.mxu0 0.0
    %1430 = vmatprep.subr.mxu0 0.0
    %1431 = vmatpush1.msra.mxu0 0.0
    %1432 = vmatprep.subr.mxu0 0.0
    %1433 = vmatpush1.msra.mxu0 0.0
    %1434 = vmatprep.subr.mxu0 0.0
    %1435 = vmatpush1.msra.mxu0 0.0
    %1436 = vmatprep.subr.mxu0 0.0
    %1437 = vmatpush1.msra.mxu0 0.0
    %1438 = vmatprep.subr.mxu0 0.0
    %1439 = vmatpush1.msra.mxu0 0.0
    %1440 = vmatprep.subr.mxu0 0.0
    %1441 = vmatpush1.msra.mxu0 %v1403
    %1442 = vmatprep.subr.mxu0 0.0
    %1443 = vmatpush1.msra.mxu0 %v1402
    %1444 = vmatprep.subr.mxu0 0.0
    %1445 = vmatpush1.msra.mxu0 %v1401
    %1446 = vmatprep.subr.mxu0 0.0
    %1447 = vmatpush1.msra.mxu0 %v1400
    %1448 = vmatprep.subr.mxu0 0.0
    %1449 = vmatpush2.msra.mxu0 0.0
    %1450 = vmatprep.subr.mxu0 0.0
    %1451 = vmatpush2.msra.mxu0 0.0
    %1452 = vmatprep.subr.mxu0 0.0
    %1453 = vmatpush2.msra.mxu0 0.0
    %1454 = vmatprep.subr.mxu0 0.0
    %1455 = vmatpush2.msra.mxu0 0.0
    %1456 = vmatprep.subr.mxu0 0.0
    %1457 = vmatpush2.msra.mxu0 0.0
    %1458 = vmatprep.subr.mxu0 0.0
    %1459 = vmatpush2.msra.mxu0 0.0
    %1460 = vmatprep.subr.mxu0 0.0
    %1461 = vmatpush2.msra.mxu0 0.0
    %1462 = vmatprep.subr.mxu0 0.0
    %1463 = vmatpush2.msra.mxu0 0.0
    %1464 = vmatprep.subr.mxu0 0.0
    %1465 = vmatpush2.msra.mxu0 0.0
    %1466 = vmatprep.subr.mxu0 0.0
    %1467 = vmatpush2.msra.mxu0 0.0
    %1468 = vmatprep.subr.mxu0 0.0
    %1469 = vmatpush2.msra.mxu0 0.0
    %1470 = vmatprep.subr.mxu0 0.0
    %1471 = vmatpush2.msra.mxu0 0.0
    %1472 = vmatprep.subr.mxu0 0.0
    %1473 = vmatpush2.msra.mxu0 0.0
    %1474 = vmatprep.subr.mxu0 0.0
    %1475 = vmatpush2.msra.mxu0 0.0
    %1476 = vmatprep.subr.mxu0 0.0
    %1477 = vmatpush2.msra.mxu0 0.0
    %1478 = vmatprep.subr.mxu0 0.0
    %1479 = vmatpush2.msra.mxu0 0.0
    %1480 = vmatprep.mubr.f32.mxu0 0.0
    %1481 = vmatmul.mubr.f32.gmra.mxu0 %v1405
    %v1482 = vpop.f32.mrf.mxu0
    %v1483 = vadd.f32 0.0, %v1482
    %v1484 = vpop.f32.mrf.mxu0
    %1485 = vmatprep.mubr.f32.mxu0 0.0
    %1486 = vmatmul.mubr.f32.gmra.mxu0 %v1408
    %v1487 = vpop.f32.mrf.mxu0
    %v1488 = vadd.f32 0.0, %v1487
    %v1489 = vpop.f32.mrf.mxu0
    %1490 = vmatprep.mubr.f32.mxu0 0.0
    %1491 = vmatmul.mubr.f32.gmra.mxu0 %v1411
    %v1492 = vpop.f32.mrf.mxu0
    %v1493 = vadd.f32 0.0, %v1492
    %v1494 = vpop.f32.mrf.mxu0
    %1495 = vmatprep.mubr.f32.mxu0 0.0
    %1496 = vmatmul.mubr.f32.gmra.mxu0 %v1414
    %v1497 = vpop.f32.mrf.mxu0
    %v1498 = vadd.f32 0.0, %v1497
    %v1499 = vpop.f32.mrf.mxu0
    %1500 = vdwg.mxu0
    %v1501 = vadd.f32 %v1382, %v1483
    %v1502 = vadd.f32 %v1387, %v1488
    %v1503 = vadd.f32 %v1392, %v1493
    %v1504 = vadd.f32 %v1397, %v1498
    %v1505 = vld [vmem:[%s5 + $0x40] sm:$0xff]
    %v1506 = vld [vmem:[%s5 + $0x48] sm:$0xff]
    %v1507 = vld [vmem:[%s5 + $0x50] sm:$0xff]
    %v1508 = vld [vmem:[%s5 + $0x58] sm:$0xff]
    %v1510 = vsel %vm187, %v1140, 0
    %v1513 = vsel %vm187, %v1145, 0
    %v1516 = vsel %vm187, %v1150, 0
    %v1519 = vsel %vm187, %v1155, 0
    %1521 = vmatprep.subr.mxu0 0.0
    %1522 = vmatpush1.msra.mxu0 0.0
    %1523 = vmatprep.subr.mxu0 0.0
    %1524 = vmatpush1.msra.mxu0 0.0
    %1525 = vmatprep.subr.mxu0 0.0
    %1526 = vmatpush1.msra.mxu0 0.0
    %1527 = vmatprep.subr.mxu0 0.0
    %1528 = vmatpush1.msra.mxu0 0.0
    %1529 = vmatprep.subr.mxu0 0.0
    %1530 = vmatpush1.msra.mxu0 0.0
    %1531 = vmatprep.subr.mxu0 0.0
    %1532 = vmatpush1.msra.mxu0 0.0
    %1533 = vmatprep.subr.mxu0 0.0
    %1534 = vmatpush1.msra.mxu0 0.0
    %1535 = vmatprep.subr.mxu0 0.0
    %1536 = vmatpush1.msra.mxu0 0.0
    %1537 = vmatprep.subr.mxu0 0.0
    %1538 = vmatpush1.msra.mxu0 0.0
    %1539 = vmatprep.subr.mxu0 0.0
    %1540 = vmatpush1.msra.mxu0 0.0
    %1541 = vmatprep.subr.mxu0 0.0
    %1542 = vmatpush1.msra.mxu0 0.0
    %1543 = vmatprep.subr.mxu0 0.0
    %1544 = vmatpush1.msra.mxu0 0.0
    %1545 = vmatprep.subr.mxu0 0.0
    %1546 = vmatpush1.msra.mxu0 %v1508
    %1547 = vmatprep.subr.mxu0 0.0
    %1548 = vmatpush1.msra.mxu0 %v1507
    %1549 = vmatprep.subr.mxu0 0.0
    %1550 = vmatpush1.msra.mxu0 %v1506
    %1551 = vmatprep.subr.mxu0 0.0
    %1552 = vmatpush1.msra.mxu0 %v1505
    %1553 = vmatprep.subr.mxu0 0.0
    %1554 = vmatpush2.msra.mxu0 0.0
    %1555 = vmatprep.subr.mxu0 0.0
    %1556 = vmatpush2.msra.mxu0 0.0
    %1557 = vmatprep.subr.mxu0 0.0
    %1558 = vmatpush2.msra.mxu0 0.0
    %1559 = vmatprep.subr.mxu0 0.0
    %1560 = vmatpush2.msra.mxu0 0.0
    %1561 = vmatprep.subr.mxu0 0.0
    %1562 = vmatpush2.msra.mxu0 0.0
    %1563 = vmatprep.subr.mxu0 0.0
    %1564 = vmatpush2.msra.mxu0 0.0
    %1565 = vmatprep.subr.mxu0 0.0
    %1566 = vmatpush2.msra.mxu0 0.0
    %1567 = vmatprep.subr.mxu0 0.0
    %1568 = vmatpush2.msra.mxu0 0.0
    %1569 = vmatprep.subr.mxu0 0.0
    %1570 = vmatpush2.msra.mxu0 0.0
    %1571 = vmatprep.subr.mxu0 0.0
    %1572 = vmatpush2.msra.mxu0 0.0
    %1573 = vmatprep.subr.mxu0 0.0
    %1574 = vmatpush2.msra.mxu0 0.0
    %1575 = vmatprep.subr.mxu0 0.0
    %1576 = vmatpush2.msra.mxu0 0.0
    %1577 = vmatprep.subr.mxu0 0.0
    %1578 = vmatpush2.msra.mxu0 0.0
    %1579 = vmatprep.subr.mxu0 0.0
    %1580 = vmatpush2.msra.mxu0 0.0
    %1581 = vmatprep.subr.mxu0 0.0
    %1582 = vmatpush2.msra.mxu0 0.0
    %1583 = vmatprep.subr.mxu0 0.0
    %1584 = vmatpush2.msra.mxu0 0.0
    %1585 = vmatprep.mubr.f32.mxu0 0.0
    %1586 = vmatmul.mubr.f32.gmra.mxu0 %v1510
    %v1587 = vpop.f32.mrf.mxu0
    %v1588 = vadd.f32 0.0, %v1587
    %v1589 = vpop.f32.mrf.mxu0
    %1590 = vmatprep.mubr.f32.mxu0 0.0
    %1591 = vmatmul.mubr.f32.gmra.mxu0 %v1513
    %v1592 = vpop.f32.mrf.mxu0
    %v1593 = vadd.f32 0.0, %v1592
    %v1594 = vpop.f32.mrf.mxu0
    %1595 = vmatprep.mubr.f32.mxu0 0.0
    %1596 = vmatmul.mubr.f32.gmra.mxu0 %v1516
    %v1597 = vpop.f32.mrf.mxu0
    %v1598 = vadd.f32 0.0, %v1597
    %v1599 = vpop.f32.mrf.mxu0
    %1600 = vmatprep.mubr.f32.mxu0 0.0
    %1601 = vmatmul.mubr.f32.gmra.mxu0 %v1519
    %v1602 = vpop.f32.mrf.mxu0
    %v1603 = vadd.f32 0.0, %v1602
    %v1604 = vpop.f32.mrf.mxu0
    %1605 = vdwg.mxu0
    %v1606 = vadd.f32 %v1501, %v1588
    %v1607 = vadd.f32 %v1502, %v1593
    %v1608 = vadd.f32 %v1503, %v1598
    %v1609 = vadd.f32 %v1504, %v1603
    %v1610 = vld [vmem:[%s5 + $0x60] sm:$0xff]
    %v1611 = vld [vmem:[%s5 + $0x68] sm:$0xff]
    %v1612 = vld [vmem:[%s5 + $0x70] sm:$0xff]
    %v1613 = vld [vmem:[%s5 + $0x78] sm:$0xff]
    %v1615 = vsel %vm187, %v1160, 0
    %v1618 = vsel %vm187, %v1165, 0
    %v1621 = vsel %vm187, %v1170, 0
    %v1624 = vsel %vm187, %v1175, 0
    %1626 = vmatprep.subr.mxu0 0.0
    %1627 = vmatpush1.msra.mxu0 0.0
    %1628 = vmatprep.subr.mxu0 0.0
    %1629 = vmatpush1.msra.mxu0 0.0
    %1630 = vmatprep.subr.mxu0 0.0
    %1631 = vmatpush1.msra.mxu0 0.0
    %1632 = vmatprep.subr.mxu0 0.0
    %1633 = vmatpush1.msra.mxu0 0.0
    %1634 = vmatprep.subr.mxu0 0.0
    %1635 = vmatpush1.msra.mxu0 0.0
    %1636 = vmatprep.subr.mxu0 0.0
    %1637 = vmatpush1.msra.mxu0 0.0
    %1638 = vmatprep.subr.mxu0 0.0
    %1639 = vmatpush1.msra.mxu0 0.0
    %1640 = vmatprep.subr.mxu0 0.0
    %1641 = vmatpush1.msra.mxu0 0.0
    %1642 = vmatprep.subr.mxu0 0.0
    %1643 = vmatpush1.msra.mxu0 0.0
    %1644 = vmatprep.subr.mxu0 0.0
    %1645 = vmatpush1.msra.mxu0 0.0
    %1646 = vmatprep.subr.mxu0 0.0
    %1647 = vmatpush1.msra.mxu0 0.0
    %1648 = vmatprep.subr.mxu0 0.0
    %1649 = vmatpush1.msra.mxu0 0.0
    %1650 = vmatprep.subr.mxu0 0.0
    %1651 = vmatpush1.msra.mxu0 %v1613
    %1652 = vmatprep.subr.mxu0 0.0
    %1653 = vmatpush1.msra.mxu0 %v1612
    %1654 = vmatprep.subr.mxu0 0.0
    %1655 = vmatpush1.msra.mxu0 %v1611
    %1656 = vmatprep.subr.mxu0 0.0
    %1657 = vmatpush1.msra.mxu0 %v1610
    %1658 = vmatprep.subr.mxu0 0.0
    %1659 = vmatpush2.msra.mxu0 0.0
    %1660 = vmatprep.subr.mxu0 0.0
    %1661 = vmatpush2.msra.mxu0 0.0
    %1662 = vmatprep.subr.mxu0 0.0
    %1663 = vmatpush2.msra.mxu0 0.0
    %1664 = vmatprep.subr.mxu0 0.0
    %1665 = vmatpush2.msra.mxu0 0.0
    %1666 = vmatprep.subr.mxu0 0.0
    %1667 = vmatpush2.msra.mxu0 0.0
    %1668 = vmatprep.subr.mxu0 0.0
    %1669 = vmatpush2.msra.mxu0 0.0
    %1670 = vmatprep.subr.mxu0 0.0
    %1671 = vmatpush2.msra.mxu0 0.0
    %1672 = vmatprep.subr.mxu0 0.0
    %1673 = vmatpush2.msra.mxu0 0.0
    %1674 = vmatprep.subr.mxu0 0.0
    %1675 = vmatpush2.msra.mxu0 0.0
    %1676 = vmatprep.subr.mxu0 0.0
    %1677 = vmatpush2.msra.mxu0 0.0
    %1678 = vmatprep.subr.mxu0 0.0
    %1679 = vmatpush2.msra.mxu0 0.0
    %1680 = vmatprep.subr.mxu0 0.0
    %1681 = vmatpush2.msra.mxu0 0.0
    %1682 = vmatprep.subr.mxu0 0.0
    %1683 = vmatpush2.msra.mxu0 0.0
    %1684 = vmatprep.subr.mxu0 0.0
    %1685 = vmatpush2.msra.mxu0 0.0
    %1686 = vmatprep.subr.mxu0 0.0
    %1687 = vmatpush2.msra.mxu0 0.0
    %1688 = vmatprep.subr.mxu0 0.0
    %1689 = vmatpush2.msra.mxu0 0.0
    %1690 = vmatprep.mubr.f32.mxu0 0.0
    %1691 = vmatmul.mubr.f32.gmra.mxu0 %v1615
    %v1692 = vpop.f32.mrf.mxu0
    %v1693 = vadd.f32 0.0, %v1692
    %v1694 = vpop.f32.mrf.mxu0
    %1695 = vmatprep.mubr.f32.mxu0 0.0
    %1696 = vmatmul.mubr.f32.gmra.mxu0 %v1618
    %v1697 = vpop.f32.mrf.mxu0
    %v1698 = vadd.f32 0.0, %v1697
    %v1699 = vpop.f32.mrf.mxu0
    %1700 = vmatprep.mubr.f32.mxu0 0.0
    %1701 = vmatmul.mubr.f32.gmra.mxu0 %v1621
    %v1702 = vpop.f32.mrf.mxu0
    %v1703 = vadd.f32 0.0, %v1702
    %v1704 = vpop.f32.mrf.mxu0
    %1705 = vmatprep.mubr.f32.mxu0 0.0
    %1706 = vmatmul.mubr.f32.gmra.mxu0 %v1624
    %v1707 = vpop.f32.mrf.mxu0
    %v1708 = vadd.f32 0.0, %v1707
    %v1709 = vpop.f32.mrf.mxu0
    %1710 = vdwg.mxu0
    %v1711 = vadd.f32 %v1606, %v1693
    %v1712 = vadd.f32 %v1607, %v1698
    %v1713 = vadd.f32 %v1608, %v1703
    %v1714 = vadd.f32 %v1609, %v1708
    %v1715 = vld [vmem:[%s5 + $0x80] sm:$0xff]
    %v1716 = vld [vmem:[%s5 + $0x88] sm:$0xff]
    %v1717 = vld [vmem:[%s5 + $0x90] sm:$0xff]
    %v1718 = vld [vmem:[%s5 + $0x98] sm:$0xff]
    %v1720 = vsel %vm187, %v1180, 0
    %v1723 = vsel %vm187, %v1185, 0
    %v1726 = vsel %vm187, %v1190, 0
    %v1729 = vsel %vm187, %v1195, 0
    %1731 = vmatprep.subr.mxu0 0.0
    %1732 = vmatpush1.msra.mxu0 0.0
    %1733 = vmatprep.subr.mxu0 0.0
    %1734 = vmatpush1.msra.mxu0 0.0
    %1735 = vmatprep.subr.mxu0 0.0
    %1736 = vmatpush1.msra.mxu0 0.0
    %1737 = vmatprep.subr.mxu0 0.0
    %1738 = vmatpush1.msra.mxu0 0.0
    %1739 = vmatprep.subr.mxu0 0.0
    %1740 = vmatpush1.msra.mxu0 0.0
    %1741 = vmatprep.subr.mxu0 0.0
    %1742 = vmatpush1.msra.mxu0 0.0
    %1743 = vmatprep.subr.mxu0 0.0
    %1744 = vmatpush1.msra.mxu0 0.0
    %1745 = vmatprep.subr.mxu0 0.0
    %1746 = vmatpush1.msra.mxu0 0.0
    %1747 = vmatprep.subr.mxu0 0.0
    %1748 = vmatpush1.msra.mxu0 0.0
    %1749 = vmatprep.subr.mxu0 0.0
    %1750 = vmatpush1.msra.mxu0 0.0
    %1751 = vmatprep.subr.mxu0 0.0
    %1752 = vmatpush1.msra.mxu0 0.0
    %1753 = vmatprep.subr.mxu0 0.0
    %1754 = vmatpush1.msra.mxu0 0.0
    %1755 = vmatprep.subr.mxu0 0.0
    %1756 = vmatpush1.msra.mxu0 %v1718
    %1757 = vmatprep.subr.mxu0 0.0
    %1758 = vmatpush1.msra.mxu0 %v1717
    %1759 = vmatprep.subr.mxu0 0.0
    %1760 = vmatpush1.msra.mxu0 %v1716
    %1761 = vmatprep.subr.mxu0 0.0
    %1762 = vmatpush1.msra.mxu0 %v1715
    %1763 = vmatprep.subr.mxu0 0.0
    %1764 = vmatpush2.msra.mxu0 0.0
    %1765 = vmatprep.subr.mxu0 0.0
    %1766 = vmatpush2.msra.mxu0 0.0
    %1767 = vmatprep.subr.mxu0 0.0
    %1768 = vmatpush2.msra.mxu0 0.0
    %1769 = vmatprep.subr.mxu0 0.0
    %1770 = vmatpush2.msra.mxu0 0.0
    %1771 = vmatprep.subr.mxu0 0.0
    %1772 = vmatpush2.msra.mxu0 0.0
    %1773 = vmatprep.subr.mxu0 0.0
    %1774 = vmatpush2.msra.mxu0 0.0
    %1775 = vmatprep.subr.mxu0 0.0
    %1776 = vmatpush2.msra.mxu0 0.0
    %1777 = vmatprep.subr.mxu0 0.0
    %1778 = vmatpush2.msra.mxu0 0.0
    %1779 = vmatprep.subr.mxu0 0.0
    %1780 = vmatpush2.msra.mxu0 0.0
    %1781 = vmatprep.subr.mxu0 0.0
    %1782 = vmatpush2.msra.mxu0 0.0
    %1783 = vmatprep.subr.mxu0 0.0
    %1784 = vmatpush2.msra.mxu0 0.0
    %1785 = vmatprep.subr.mxu0 0.0
    %1786 = vmatpush2.msra.mxu0 0.0
    %1787 = vmatprep.subr.mxu0 0.0
    %1788 = vmatpush2.msra.mxu0 0.0
    %1789 = vmatprep.subr.mxu0 0.0
    %1790 = vmatpush2.msra.mxu0 0.0
    %1791 = vmatprep.subr.mxu0 0.0
    %1792 = vmatpush2.msra.mxu0 0.0
    %1793 = vmatprep.subr.mxu0 0.0
    %1794 = vmatpush2.msra.mxu0 0.0
    %1795 = vmatprep.mubr.f32.mxu0 0.0
    %1796 = vmatmul.mubr.f32.gmra.mxu0 %v1720
    %v1797 = vpop.f32.mrf.mxu0
    %v1798 = vadd.f32 0.0, %v1797
    %v1799 = vpop.f32.mrf.mxu0
    %1800 = vmatprep.mubr.f32.mxu0 0.0
    %1801 = vmatmul.mubr.f32.gmra.mxu0 %v1723
    %v1802 = vpop.f32.mrf.mxu0
    %v1803 = vadd.f32 0.0, %v1802
    %v1804 = vpop.f32.mrf.mxu0
    %1805 = vmatprep.mubr.f32.mxu0 0.0
    %1806 = vmatmul.mubr.f32.gmra.mxu0 %v1726
    %v1807 = vpop.f32.mrf.mxu0
    %v1808 = vadd.f32 0.0, %v1807
    %v1809 = vpop.f32.mrf.mxu0
    %1810 = vmatprep.mubr.f32.mxu0 0.0
    %1811 = vmatmul.mubr.f32.gmra.mxu0 %v1729
    %v1812 = vpop.f32.mrf.mxu0
    %v1813 = vadd.f32 0.0, %v1812
    %v1814 = vpop.f32.mrf.mxu0
    %1815 = vdwg.mxu0
    %v1816 = vadd.f32 %v1711, %v1798
    %v1817 = vadd.f32 %v1712, %v1803
    %v1818 = vadd.f32 %v1713, %v1808
    %v1819 = vadd.f32 %v1714, %v1813
    %v1820 = vld [vmem:[%s6] sm:$0x1]
    %v1822 = vlaneseq
    %v1823 = vshrl.u32 %v1822, 7
    %v1824 = vsub.s32 0, %v1823
    %v1825 = vrot.slane %v1820, %v1824
    %v1827 = vadd.f32 %v1816, %v1825
    %v1828 = vadd.f32 %v1817, %v1825
    %v1829 = vadd.f32 %v1818, %v1825
    %v1830 = vadd.f32 %v1819, %v1825
    %v1831 = vmax.f32 %v1827, 0.0
    %v1832 = vmax.f32 %v1828, 0.0
    %v1833 = vmax.f32 %v1829, 0.0
    %v1834 = vmax.f32 %v1830, 0.0
    %v1835 = vld [vmem:[%s7] sm:$0xff]
    %v1836 = vld [vmem:[%s7 + $0x8] sm:$0xff]
    %v1837 = vld [vmem:[%s7 + $0x10] sm:$0xff]
    %v1838 = vld [vmem:[%s7 + $0x18] sm:$0xff]
    %v1839 = vld [vmem:[%s8] sm:$0x1]
    %v1841 = vlaneseq
    %v1842 = vshrl.u32 %v1841, 7
    %v1843 = vsub.s32 0, %v1842
    %v1844 = vrot.slane %v1839, %v1843
    %v1847 = vsel %vm187, %v1831, 0
    %v1850 = vsel %vm187, %v1832, 0
    %v1853 = vsel %vm187, %v1833, 0
    %v1856 = vsel %vm187, %v1834, 0
    %1858 = vmatprep.subr.mxu0 0.0
    %1859 = vmatpush1.msra.mxu0 0.0
    %1860 = vmatprep.subr.mxu0 0.0
    %1861 = vmatpush1.msra.mxu0 0.0
    %1862 = vmatprep.subr.mxu0 0.0
    %1863 = vmatpush1.msra.mxu0 0.0
    %1864 = vmatprep.subr.mxu0 0.0
    %1865 = vmatpush1.msra.mxu0 0.0
    %1866 = vmatprep.subr.mxu0 0.0
    %1867 = vmatpush1.msra.mxu0 0.0
    %1868 = vmatprep.subr.mxu0 0.0
    %1869 = vmatpush1.msra.mxu0 0.0
    %1870 = vmatprep.subr.mxu0 0.0
    %1871 = vmatpush1.msra.mxu0 0.0
    %1872 = vmatprep.subr.mxu0 0.0
    %1873 = vmatpush1.msra.mxu0 0.0
    %1874 = vmatprep.subr.mxu0 0.0
    %1875 = vmatpush1.msra.mxu0 0.0
    %1876 = vmatprep.subr.mxu0 0.0
    %1877 = vmatpush1.msra.mxu0 0.0
    %1878 = vmatprep.subr.mxu0 0.0
    %1879 = vmatpush1.msra.mxu0 0.0
    %1880 = vmatprep.subr.mxu0 0.0
    %1881 = vmatpush1.msra.mxu0 0.0
    %1882 = vmatprep.subr.mxu0 0.0
    %1883 = vmatpush1.msra.mxu0 %v1838
    %1884 = vmatprep.subr.mxu0 0.0
    %1885 = vmatpush1.msra.mxu0 %v1837
    %1886 = vmatprep.subr.mxu0 0.0
    %1887 = vmatpush1.msra.mxu0 %v1836
    %1888 = vmatprep.subr.mxu0 0.0
    %1889 = vmatpush1.msra.mxu0 %v1835
    %1890 = vmatprep.subr.mxu0 0.0
    %1891 = vmatpush2.msra.mxu0 0.0
    %1892 = vmatprep.subr.mxu0 0.0
    %1893 = vmatpush2.msra.mxu0 0.0
    %1894 = vmatprep.subr.mxu0 0.0
    %1895 = vmatpush2.msra.mxu0 0.0
    %1896 = vmatprep.subr.mxu0 0.0
    %1897 = vmatpush2.msra.mxu0 0.0
    %1898 = vmatprep.subr.mxu0 0.0
    %1899 = vmatpush2.msra.mxu0 0.0
    %1900 = vmatprep.subr.mxu0 0.0
    %1901 = vmatpush2.msra.mxu0 0.0
    %1902 = vmatprep.subr.mxu0 0.0
    %1903 = vmatpush2.msra.mxu0 0.0
    %1904 = vmatprep.subr.mxu0 0.0
    %1905 = vmatpush2.msra.mxu0 0.0
    %1906 = vmatprep.subr.mxu0 0.0
    %1907 = vmatpush2.msra.mxu0 0.0
    %1908 = vmatprep.subr.mxu0 0.0
    %1909 = vmatpush2.msra.mxu0 0.0
    %1910 = vmatprep.subr.mxu0 0.0
    %1911 = vmatpush2.msra.mxu0 0.0
    %1912 = vmatprep.subr.mxu0 0.0
    %1913 = vmatpush2.msra.mxu0 0.0
    %1914 = vmatprep.subr.mxu0 0.0
    %1915 = vmatpush2.msra.mxu0 0.0
    %1916 = vmatprep.subr.mxu0 0.0
    %1917 = vmatpush2.msra.mxu0 0.0
    %1918 = vmatprep.subr.mxu0 0.0
    %1919 = vmatpush2.msra.mxu0 0.0
    %1920 = vmatprep.subr.mxu0 0.0
    %1921 = vmatpush2.msra.mxu0 0.0
    %1922 = vmatprep.mubr.f32.mxu0 0.0
    %1923 = vmatmul.mubr.f32.gmra.mxu0 %v1847
    %v1924 = vpop.f32.mrf.mxu0
    %v1925 = vadd.f32 %v1844, %v1924
    %v1926 = vpop.f32.mrf.mxu0
    %1927 = vmatprep.mubr.f32.mxu0 0.0
    %1928 = vmatmul.mubr.f32.gmra.mxu0 %v1850
    %v1929 = vpop.f32.mrf.mxu0
    %v1930 = vadd.f32 %v1844, %v1929
    %v1931 = vpop.f32.mrf.mxu0
    %1932 = vmatprep.mubr.f32.mxu0 0.0
    %1933 = vmatmul.mubr.f32.gmra.mxu0 %v1853
    %v1934 = vpop.f32.mrf.mxu0
    %v1935 = vadd.f32 %v1844, %v1934
    %v1936 = vpop.f32.mrf.mxu0
    %1937 = vmatprep.mubr.f32.mxu0 0.0
    %1938 = vmatmul.mubr.f32.gmra.mxu0 %v1856
    %v1939 = vpop.f32.mrf.mxu0
    %v1940 = vadd.f32 %v1844, %v1939
    %v1941 = vpop.f32.mrf.mxu0
    %1942 = vdwg.mxu0
    %v1943 = vxor.u32 %v1925, 2147483648
    %v1944 = vxor.u32 %v1930, 2147483648
    %v1945 = vxor.u32 %v1935, 2147483648
    %v1946 = vxor.u32 %v1940, 2147483648
    %v1947 = vmul.f32 %v1943, 1.442695
    %v1948 = vpow.pop %v1947
    %v1949 = vmul.f32 %v1944, 1.442695
    %v1950 = vpow.pop %v1949
    %v1951 = vmul.f32 %v1945, 1.442695
    %v1952 = vpow.pop %v1951
    %v1953 = vmul.f32 %v1946, 1.442695
    %v1954 = vpow.pop %v1953
    %v1955 = vadd.f32 %v1948, 1.0
    %v1956 = vadd.f32 %v1950, 1.0
    %v1957 = vadd.f32 %v1952, 1.0
    %v1958 = vadd.f32 %v1954, 1.0
    %v1959 = vrcp.pop %v1955
    %v1960 = vmul.f32 1.0, %v1959
    %v1961 = vrcp.pop %v1956
    %v1962 = vmul.f32 1.0, %v1961
    %v1963 = vrcp.pop %v1957
    %v1964 = vmul.f32 1.0, %v1963
    %v1965 = vrcp.pop %v1958
    %v1966 = vmul.f32 1.0, %v1965
    %1968 = vset.pattern.permute.xlu0 4
    %1969 = vperm.xlu0 %1968, %v1960
    %v1970 = vpop.permute.xlu0 %1969
    %1973 = vset.pattern.permute.xlu0 4
    %1974 = vperm.xlu0 %1973, %v1962
    %v1975 = vpop.permute.xlu0 %1974
    %1978 = vset.pattern.permute.xlu0 4
    %1979 = vperm.xlu0 %1978, %v1964
    %v1980 = vpop.permute.xlu0 %1979
    %1983 = vset.pattern.permute.xlu0 4
    %1984 = vperm.xlu0 %1983, %v1966
    %v1985 = vpop.permute.xlu0 %1984
    %v1987 = vmul.f32 %v1970, %v1925
    %v1988 = vmul.f32 %v1975, %v1930
    %v1989 = vmul.f32 %v1980, %v1935
    %v1990 = vmul.f32 %v1985, %v1940
    %vm1991 = vcmask 31744
    %v1992 = vsel %vm1991, %v1987, 0.0
    %v1993 = vsel %vm1991, %v1988, 0.0
    %v1994 = vadd.f32 %v1992, %v1993
    %v1995 = vrot.slane %v1994, 4
    %v1996 = vadd.f32 %v1994, %v1995
    %v1997 = vrot.slane %v1996, 2
    %v1998 = vadd.f32 %v1996, %v1997
    %v1999 = vrot.slane %v1998, 1
    %v2000 = vadd.f32 %v1998, %v1999
    %v2001 = vrcp.pop 16.0
    %v2002 = vmul.f32 %v2000, %v2001
    %vm2003 = vcmask 24576
    %2004 = vst.msk [vmem:[#allocation2] sm:$0x1] %vm2003, %v2002
    %v2005 = vsel %vm1991, %v1989, 0.0
    %v2006 = vsel %vm1991, %v1990, 0.0
    %v2007 = vadd.f32 %v2005, %v2006
    %v2008 = vrot.slane %v2007, 4
    %v2009 = vadd.f32 %v2007, %v2008
    %v2010 = vrot.slane %v2009, 2
    %v2011 = vadd.f32 %v2009, %v2010
    %v2012 = vrot.slane %v2011, 1
    %v2013 = vadd.f32 %v2011, %v2012
    %v2014 = vmul.f32 %v2013, %v2001
    %2015 = vst.msk [vmem:[#allocation2 + $0x1] sm:$0x1] %vm2003, %v2014
    // Predicated region
    $region38: #{chebynet_forward.1} parent=1 // pred_check
      _
    $region39: #{chebynet_forward.1} parent=1 // pred_check_branch
      %2017 = sbr.rel (0) target = $region41
    $region40: #{chebynet_forward.1} parent=1 // pred_region
      %s2019 = ssub.s32 32, 32
      %2020 = vsyncadd [#allocation3], %s2019
      %s2022 = sshll.u32 [#allocation2], 4
      %s2023 = int_to_ptr.vmem [resolvable:$true] %s2022
      %2025 = dma.vmem_to_hbm [thread:$0]  %s2023, 32, %s9, [#allocation3]
    $region41: #{chebynet_forward.1} parent=1 // pred_fallthru
      _
    // Predicated region
    $region42: #{chebynet_forward.1} parent=1 // pred_check
      _
    $region43: #{chebynet_forward.1} parent=1 // pred_check_branch
      %2027 = sbr.rel (0) target = $region45
    $region44: #{chebynet_forward.1} parent=1 // pred_region
      %2028 = dma.done [#allocation3], 32
    $region45: #{chebynet_forward.1} parent=1 // pred_fallthru
      _
    %2029 = vsyncpa [#allocation3], 1

</llo_original>
